<compile_context>
chip_gen: v7x
topology: tpu7x:2x2x1
jax: 0.10.0
libtpu: 0.0.40
codegen_flags: <defaults>
</compile_context>

<pallas_src>
import functools

import jax
import jax.numpy as jnp
from jax.experimental import pallas as pl
from jax.experimental.pallas import tpu as pltpu


_VMEM_LIMIT_BYTES = 48 * 1024 * 1024  # > 16/32 MiB scoped defaults, < v7x 64 MiB physical
_MAX_GROUP = 8                        # caps in-kernel unrolling (bounds vreg live ranges)


def _pick_group(num_images, c, p, budget_bytes=24 << 20):
    """Largest divisor of num_images whose double-buffered blocks fit the VMEM budget."""
    per_image = 8 * c * p  # bf16 in + bf16 out, each double-buffered
    g = max(1, min(num_images, _MAX_GROUP, budget_bytes // max(per_image, 1)))
    while num_images % g:
        g -= 1
    return g


def _dw_tap_masks(height, width):
    """(9, H*W) f32 validity masks for the 3x3 zero-padded depthwise taps."""
    p = jnp.arange(height * width, dtype=jnp.int32)
    row, col = p // width, p % width
    masks = []
    for dy in (-1, 0, 1):
        for dx in (-1, 0, 1):
            m = jnp.ones_like(p, dtype=jnp.bool_)
            if dy == -1:
                m = m & (row >= 1)
            if dy == 1:
                m = m & (row <= height - 2)
            if dx == -1:
                m = m & (col >= 1)
            if dx == 1:
                m = m & (col <= width - 2)
            masks.append(m)
    return jnp.stack(masks).astype(jnp.float32)


# --------------------------- fused 1x1 + depthwise 3x3 ------------------------

def _proj_fused_kernel(x_ref, w1_ref, b1_ref, wd_ref, bd_ref, masks_ref, o_ref, *,
                       width):
    """G images per grid step: y = conv1x1(x); out = dwconv3x3(y) (zero pad 1).

    x_ref:     (G, C, P) bf16   channels-first flattened images, P = H*W
    w1_ref:    (C, C)    bf16   1x1 conv weight (out, in)
    b1_ref:    (C, 1)    f32    1x1 conv bias
    wd_ref:    (C, 9)    f32    depthwise taps, row-major (ky, kx)
    bd_ref:    (C, 1)    f32    depthwise bias
    masks_ref: (9, P)    f32    per-tap border-validity masks (zero padding)
    o_ref:     (G, C, P) bf16
    """
    G, C, P = o_ref.shape
    W = width
    w1 = w1_ref[...]
    b1 = b1_ref[...]
    wd = wd_ref[...]
    bd = bd_ref[...]
    masks = masks_ref[...]

    for g in range(G):
        # 1x1 conv on the MXU: bf16 x bf16 inputs, f32 accumulation.
        y = jnp.dot(w1, x_ref[g, :, :], preferred_element_type=jnp.float32) + b1
        # Depthwise 3x3: lane rolls (XLU slot) + border masks, accumulated on the VPU.
        # tap[p] = y[p + dy*W + dx] for valid positions, 0 outside the image.
        acc = jnp.zeros((C, P), jnp.float32)
        t = 0
        for dy in (-1, 0, 1):
            for dx in (-1, 0, 1):
                off = dy * W + dx
                tap = y if off == 0 else pltpu.roll(y, (-off) % P, axis=1)
                acc = acc + tap * masks[t:t + 1, :] * wd[:, t:t + 1]
                t += 1
        o_ref[g, :, :] = (acc + bd).astype(o_ref.dtype)


def fused_projection(x_bf16, w1_bf16, b1, wd, bd, masks, width, group):
    """x_bf16: (BN, C, P) bf16 -> (BN, C, P) bf16 (1x1 conv then depthwise 3x3)."""
    BN, C, P = x_bf16.shape
    kernel = functools.partial(_proj_fused_kernel, width=width)
    return pl.pallas_call(
        kernel,
        out_shape=jax.ShapeDtypeStruct((BN, C, P), jnp.bfloat16),
        grid=(BN // group,),
        in_specs=[
            pl.BlockSpec((group, C, P), lambda i: (i, 0, 0)),
            pl.BlockSpec((C, C), lambda i: (0, 0)),
            pl.BlockSpec((C, 1), lambda i: (0, 0)),
            pl.BlockSpec((C, 9), lambda i: (0, 0)),
            pl.BlockSpec((C, 1), lambda i: (0, 0)),
            pl.BlockSpec((9, P), lambda i: (0, 0)),
        ],
        out_specs=pl.BlockSpec((group, C, P), lambda i: (i, 0, 0)),
        compiler_params=pltpu.CompilerParams(
            dimension_semantics=("parallel",),
            vmem_limit_bytes=_VMEM_LIMIT_BYTES),
    )(x_bf16, w1_bf16, b1, wd, bd, masks)


# --------------------------- fused attention + project_out --------------------

def _attn_out_kernel(q_ref, k_ref, v_ref, trow_ref, hmask_ref, wo_ref, bo_ref, o_ref,
                     *, n_q, n_kv):
    """One (B*T) row per grid step, all heads via a masked full-channel Gram.

    q_ref:  (n_q,  C, D) bf16       k_ref/v_ref: (n_kv, C, D) bf16
    trow_ref:  (C, 1)        f32    per-row temperature (temperature[head_of_row])
    hmask_ref: (C, n_kv*C)   f32    additive mask: 0 on same-head blocks, -1e30 elsewhere
    wo_ref: (C, C) bf16, bo_ref: (C, 1) f32 (project_out)
    o_ref:  (n_q, C, D) f32
    """
    _, C, D = q_ref.shape
    eps2 = 1e-24  # (F.normalize eps = 1e-12) ** 2

    # K/V path: normalize + cast / stack ONCE per grid step (hoisted out of the q loop).
    kn_parts, v_parts = [], []
    for j in range(n_kv):
        k = k_ref[j, :, :].astype(jnp.float32)
        kn = k * jax.lax.rsqrt(
            jnp.maximum(jnp.sum(k * k, axis=-1, keepdims=True), eps2))
        kn_parts.append(kn)
        v_parts.append(v_ref[j, :, :])
    kn_all = jnp.concatenate(kn_parts, axis=0).astype(jnp.bfloat16)   # (n_kv*C, D)
    v_all = jnp.concatenate(v_parts, axis=0)                          # (n_kv*C, D) bf16

    trow = trow_ref[...]       # (C, 1)
    hmask = hmask_ref[...]     # (C, n_kv*C)
    wo = wo_ref[...]           # (C, C) bf16
    bo = bo_ref[...]           # (C, 1) f32

    for i in range(n_q):
        q = q_ref[i, :, :].astype(jnp.float32)
        qn = q * jax.lax.rsqrt(
            jnp.maximum(jnp.sum(q * q, axis=-1, keepdims=True), eps2))
        # Full-channel Gram in one MXU call; cross-head blocks masked to -1e30 so the
        # row-wise softmax is exactly the per-head softmax of the reference.
        s = jax.lax.dot_general(qn.astype(jnp.bfloat16), kn_all,
                                (((1,), (1,)), ((), ())),
                                preferred_element_type=jnp.float32)   # (C, n_kv*C)
        s = s * trow + hmask
        p = jnp.exp(s - jnp.max(s, axis=-1, keepdims=True))
        p = (p * pl.reciprocal(jnp.sum(p, axis=-1, keepdims=True), approx=True)
             ).astype(jnp.bfloat16)
        # Masked columns of p are exactly zero, so one p @ v_all is the per-head result.
        attn_out = jnp.dot(p, v_all, preferred_element_type=jnp.float32)  # (C, D)
        # Fused project_out 1x1 conv; output written once per image (lane-dense).
        o_ref[i, :, :] = (jnp.dot(wo, attn_out.astype(jnp.bfloat16),
                                  preferred_element_type=jnp.float32) + bo
                          ).astype(o_ref.dtype)


def fused_attention_project_out(qf, kf, vf, trow, hmask, wo_bf16, bo, *, n_q, n_kv):
    """qf: (B*T*n_q, C, P) bf16, kf/vf: (B*T*n_kv, C, P) bf16 -> (B*T*n_q, C, P) f32."""
    BTNq, C, P = qf.shape
    BT = BTNq // n_q
    kernel = functools.partial(_attn_out_kernel, n_q=n_q, n_kv=n_kv)
    return pl.pallas_call(
        kernel,
        out_shape=jax.ShapeDtypeStruct((BTNq, C, P), jnp.float32),
        grid=(BT,),
        in_specs=[
            pl.BlockSpec((n_q, C, P), lambda b: (b, 0, 0)),
            pl.BlockSpec((n_kv, C, P), lambda b: (b, 0, 0)),
            pl.BlockSpec((n_kv, C, P), lambda b: (b, 0, 0)),
            pl.BlockSpec((C, 1), lambda b: (0, 0)),
            pl.BlockSpec((C, n_kv * C), lambda b: (0, 0)),
            pl.BlockSpec((C, C), lambda b: (0, 0)),
            pl.BlockSpec((C, 1), lambda b: (0, 0)),
        ],
        out_specs=pl.BlockSpec((n_q, C, P), lambda b: (b, 0, 0)),
        compiler_params=pltpu.CompilerParams(
            dimension_semantics=("parallel",),
            vmem_limit_bytes=_VMEM_LIMIT_BYTES),
    )(qf, kf, vf, trow, hmask, wo_bf16, bo)


# --------------------------- parameters --------------------------------------

def init_params(key, dim, num_heads):
    keys = jax.random.split(key, 14)
    w1 = lambda k: 0.2 * jax.random.normal(k, (dim, dim, 1, 1), jnp.float32)
    wd = lambda k: 0.2 * jax.random.normal(k, (dim, 1, 3, 3), jnp.float32)
    bb = lambda k: 0.1 * jax.random.normal(k, (dim,), jnp.float32)
    return dict(
        # nn.Parameter(torch.ones(num_heads,1,1)); made non-trivial (deterministic)
        temperature=(1.0 + 0.25 * jnp.arange(num_heads, dtype=jnp.float32)
                     ).reshape(num_heads, 1, 1),
        wq1=w1(keys[0]), bq1=bb(keys[1]),
        wk1=w1(keys[2]), bk1=bb(keys[3]),
        wv1=w1(keys[4]), bv1=bb(keys[5]),
        wqd=wd(keys[6]), bqd=bb(keys[7]),
        wkd=wd(keys[8]), bkd=bb(keys[9]),
        wvd=wd(keys[10]), bvd=bb(keys[11]),
        wo=w1(keys[12]), bo=bb(keys[13]),
    )


# --------------------------- forward (Pallas path) ----------------------------

def tr_attention_forward(params, q6, k6, v6, num_heads):
    # residual=False path (module default).
    B, Tq, Nq, C, H, W = q6.shape
    Bk, T, N = k6.shape[:3]
    assert Bk == B and T == Tq, "kernel assumes matching (B, T) between q and k/v"
    P = H * W
    cph = C // num_heads

    masks = _dw_tap_masks(H, W)                                     # (9, P)

    # Per-row temperature + block-diagonal same-head mask for the full-channel Gram.
    trow = jnp.repeat(params["temperature"].reshape(num_heads), cph).reshape(C, 1)
    head_of = jnp.arange(C, dtype=jnp.int32) // cph
    same_head = head_of[:, None] == jnp.tile(head_of, (N,))[None, :]
    hmask = jnp.where(same_head, 0.0, -1e30).astype(jnp.float32)    # (C, N*C)

    def prep_w(w1, b1, wd, bd):
        return (w1[:, :, 0, 0].astype(jnp.bfloat16), b1.reshape(C, 1),
                wd[:, 0].reshape(C, 9), bd.reshape(C, 1))

    # Free reshapes only (no transposes): (B,T,N,C,H,W) -> (B*T*N, C, H*W); bf16 DMA.
    g_q = _pick_group(B * Tq * Nq, C, P)
    g_kv = _pick_group(B * T * N, C, P)
    qf = fused_projection(q6.reshape(B * Tq * Nq, C, P).astype(jnp.bfloat16),
                          *prep_w(params["wq1"], params["bq1"],
                                  params["wqd"], params["bqd"]),
                          masks, W, g_q)
    kf = fused_projection(k6.reshape(B * T * N, C, P).astype(jnp.bfloat16),
                          *prep_w(params["wk1"], params["bk1"],
                                  params["wkd"], params["bkd"]),
                          masks, W, g_kv)
    vf = fused_projection(v6.reshape(B * T * N, C, P).astype(jnp.bfloat16),
                          *prep_w(params["wv1"], params["bv1"],
                                  params["wvd"], params["bvd"]),
                          masks, W, g_kv)

    out = fused_attention_project_out(
        qf, kf, vf, trow, hmask,
        params["wo"][:, :, 0, 0].astype(jnp.bfloat16),
        params["bo"].reshape(C, 1),
        n_q=Nq, n_kv=N)
    return out.reshape(B, Tq, Nq, C, H, W)


# --------------------------- pure-JAX reference -------------------------------

def tr_attention_reference(params, q6, k6, v6, num_heads):
    HI = jax.lax.Precision.HIGHEST
    B, Tq, Nq, C, H, W = q6.shape
    _, T, N = k6.shape[:3]
    Cph = C // num_heads

    def pw(x4, w, b):
        return (jnp.einsum("bchw,oc->bohw", x4, w[:, :, 0, 0], precision=HI)
                + b[None, :, None, None])

    def dw(x4, w, b):
        xp = jnp.pad(x4, ((0, 0), (0, 0), (1, 1), (1, 1)))
        acc = jnp.zeros_like(x4)
        for dy in range(3):
            for dx in range(3):
                acc = acc + xp[:, :, dy:dy + H, dx:dx + W] * \
                    w[:, 0, dy, dx][None, :, None, None]
        return acc + b[None, :, None, None]

    q4 = q6.reshape(B * Tq * Nq, C, H, W)
    k4 = k6.reshape(B * T * N, C, H, W)
    v4 = v6.reshape(B * T * N, C, H, W)
    qi = dw(pw(q4, params["wq1"], params["bq1"]), params["wqd"], params["bqd"])
    ki = dw(pw(k4, params["wk1"], params["bk1"]), params["wkd"], params["bkd"])
    vi = dw(pw(v4, params["wv1"], params["bv1"]), params["wvd"], params["bvd"])

    def to_heads(x4, T_, N_):
        x = x4.reshape(B, T_, N_, num_heads, Cph, H, W)
        x = jnp.transpose(x, (0, 1, 3, 2, 4, 5, 6))
        return x.reshape(B * T_, num_heads, N_ * Cph, H * W)

    qh, kh, vh = to_heads(qi, Tq, Nq), to_heads(ki, T, N), to_heads(vi, T, N)
    l2n = lambda x: x / jnp.maximum(jnp.linalg.norm(x, axis=-1, keepdims=True), 1e-12)
    qh, kh = l2n(qh), l2n(kh)
    attn = jnp.einsum("bhmd,bhnd->bhmn", qh, kh, precision=HI) * \
        params["temperature"][None]
    attn = jax.nn.softmax(attn, axis=-1)
    oh = jnp.einsum("bhmn,bhnd->bhmd", attn, vh, precision=HI)
    o = oh.reshape(B, Tq, num_heads, Nq, Cph, H, W)
    o = jnp.transpose(o, (0, 1, 3, 2, 4, 5, 6)).reshape(B * Tq * Nq, C, H, W)
    o = pw(o, params["wo"], params["bo"])
    return o.reshape(B, Tq, Nq, C, H, W)


# --------------------------- main ---------------------------------------------

if __name__ == "__main__":
    dim, num_heads = 8, 2
    B, T, N, H, W = 2, 1, 2, 8, 16   # P = H*W = 128 (lane-aligned)

    key = jax.random.PRNGKey(0)
    kq, kk, kv, kp = jax.random.split(key, 4)
    q = jax.random.normal(kq, (B, T, N, dim, H, W), jnp.float32)
    k = jax.random.normal(kk, (B, T, N, dim, H, W), jnp.float32)
    v = jax.random.normal(kv, (B, T, N, dim, H, W), jnp.float32)
    params = init_params(kp, dim, num_heads)

    fwd = jax.jit(functools.partial(tr_attention_forward, num_heads=num_heads))
    out = jax.block_until_ready(fwd(params, q, k, v))

    ref = tr_attention_reference(params, q, k, v, num_heads)
    assert out.shape == (B, T, N, dim, H, W), out.shape
    max_err = float(jnp.max(jnp.abs(out - ref)))
    # Tolerance reflects bf16 MXU inputs with f32 accumulation vs the f32 reference.
    assert jnp.allclose(out, ref, rtol=5e-2, atol=2e-2), f"max abs err {max_err}"
    print("KERNEL_OK")
</pallas_src>

<mosaic_0001>
module attributes {stable_mosaic.version = 11 : i64} {
  func.func @_proj_fused_kernel(%arg0: i32, %arg1: memref<4x8x128xbf16, #tpu.memory_space<vmem>>, %arg2: memref<8x8xbf16, #tpu.memory_space<vmem>>, %arg3: memref<8x1xf32, #tpu.memory_space<vmem>>, %arg4: memref<8x9xf32, #tpu.memory_space<vmem>>, %arg5: memref<8x1xf32, #tpu.memory_space<vmem>>, %arg6: memref<9x128xf32, #tpu.memory_space<vmem>>, %arg7: memref<4x8x128xbf16, #tpu.memory_space<vmem>>) attributes {dimension_semantics = [#tpu.dimension_semantics<parallel>], iteration_bounds = array<i64: 1>, scalar_prefetch = 0 : i64, scratch_operands = 0 : i64, tpu.core_type = #tpu.core_type<tc>, window_params = [{transform_indices = @transform_0, window_bounds = array<i64: 4, 8, 128>}, {pipeline_mode = #tpu.pipeline_mode<synchronous>, transform_indices = @transform_1, window_bounds = array<i64: 8, 8>}, {pipeline_mode = #tpu.pipeline_mode<synchronous>, transform_indices = @transform_2, window_bounds = array<i64: 8, 1>}, {pipeline_mode = #tpu.pipeline_mode<synchronous>, transform_indices = @transform_3, window_bounds = array<i64: 8, 9>}, {pipeline_mode = #tpu.pipeline_mode<synchronous>, transform_indices = @transform_4, window_bounds = array<i64: 8, 1>}, {pipeline_mode = #tpu.pipeline_mode<synchronous>, transform_indices = @transform_5, window_bounds = array<i64: 9, 128>}, {transform_indices = @transform_6, window_bounds = array<i64: 4, 8, 128>}]} {
    %c0 = arith.constant 0 : index
    %c0_0 = arith.constant 0 : index
    %0 = vector.load %arg2[%c0, %c0_0] : memref<8x8xbf16, #tpu.memory_space<vmem>>, vector<8x8xbf16>
    %c0_1 = arith.constant 0 : index
    %c0_2 = arith.constant 0 : index
    %1 = vector.load %arg3[%c0_1, %c0_2] : memref<8x1xf32, #tpu.memory_space<vmem>>, vector<8x1xf32>
    %c0_3 = arith.constant 0 : index
    %c0_4 = arith.constant 0 : index
    %2 = vector.load %arg4[%c0_3, %c0_4] : memref<8x9xf32, #tpu.memory_space<vmem>>, vector<8x9xf32>
    %c0_5 = arith.constant 0 : index
    %c0_6 = arith.constant 0 : index
    %3 = vector.load %arg5[%c0_5, %c0_6] : memref<8x1xf32, #tpu.memory_space<vmem>>, vector<8x1xf32>
    %c0_7 = arith.constant 0 : index
    %c0_8 = arith.constant 0 : index
    %4 = vector.load %arg6[%c0_7, %c0_8] : memref<9x128xf32, #tpu.memory_space<vmem>>, vector<9x128xf32>
    %c0_9 = arith.constant 0 : index
    %c0_10 = arith.constant 0 : index
    %c0_11 = arith.constant 0 : index
    %5 = vector.load %arg1[%c0_9, %c0_10, %c0_11] : memref<4x8x128xbf16, #tpu.memory_space<vmem>>, vector<1x8x128xbf16>
    %6 = vector.shape_cast %5 : vector<1x8x128xbf16> to vector<8x128xbf16>
    %cst = arith.constant dense<0.000000e+00> : vector<8x128xf32>
    %7 = tpu.matmul %0, %6, %cst {dimension_numbers = #tpu.dot_dimension_numbers<[1], [0], [0], [1], [0, 0, 1, 1], [], []>} : vector<8x8xbf16>, vector<8x128xbf16>, vector<8x128xf32> -> vector<8x128xf32>
    %8 = vector.broadcast %1 : vector<8x1xf32> to vector<8x128xf32>
    %9 = arith.addf %7, %8 : vector<8x128xf32>
    %cst_12 = arith.constant 0.000000e+00 : f32
    %10 = vector.broadcast %cst_12 : f32 to vector<8x128xf32>
    %c17_i32 = arith.constant 17 : i32
    %11 = tpu.dynamic_rotate %9 by %c17_i32 dim 1 : vector<8x128xf32>, i32 -> vector<8x128xf32>
    %12 = vector.extract_strided_slice %4 {offsets = [0, 0], sizes = [1, 128], strides = [1, 1]} : vector<9x128xf32> to vector<1x128xf32>
    %13 = vector.broadcast %12 : vector<1x128xf32> to vector<8x128xf32>
    %14 = arith.mulf %11, %13 : vector<8x128xf32>
    %15 = vector.extract_strided_slice %2 {offsets = [0, 0], sizes = [8, 1], strides = [1, 1]} : vector<8x9xf32> to vector<8x1xf32>
    %16 = vector.broadcast %15 : vector<8x1xf32> to vector<8x128xf32>
    %17 = arith.mulf %14, %16 : vector<8x128xf32>
    %18 = arith.addf %10, %17 : vector<8x128xf32>
    %c16_i32 = arith.constant 16 : i32
    %19 = tpu.dynamic_rotate %9 by %c16_i32 dim 1 : vector<8x128xf32>, i32 -> vector<8x128xf32>
    %20 = vector.extract_strided_slice %4 {offsets = [1, 0], sizes = [1, 128], strides = [1, 1]} : vector<9x128xf32> to vector<1x128xf32>
    %21 = vector.broadcast %20 : vector<1x128xf32> to vector<8x128xf32>
    %22 = arith.mulf %19, %21 : vector<8x128xf32>
    %23 = vector.extract_strided_slice %2 {offsets = [0, 1], sizes = [8, 1], strides = [1, 1]} : vector<8x9xf32> to vector<8x1xf32>
    %24 = vector.broadcast %23 : vector<8x1xf32> to vector<8x128xf32>
    %25 = arith.mulf %22, %24 : vector<8x128xf32>
    %26 = arith.addf %18, %25 : vector<8x128xf32>
    %c15_i32 = arith.constant 15 : i32
    %27 = tpu.dynamic_rotate %9 by %c15_i32 dim 1 : vector<8x128xf32>, i32 -> vector<8x128xf32>
    %28 = vector.extract_strided_slice %4 {offsets = [2, 0], sizes = [1, 128], strides = [1, 1]} : vector<9x128xf32> to vector<1x128xf32>
    %29 = vector.broadcast %28 : vector<1x128xf32> to vector<8x128xf32>
    %30 = arith.mulf %27, %29 : vector<8x128xf32>
    %31 = vector.extract_strided_slice %2 {offsets = [0, 2], sizes = [8, 1], strides = [1, 1]} : vector<8x9xf32> to vector<8x1xf32>
    %32 = vector.broadcast %31 : vector<8x1xf32> to vector<8x128xf32>
    %33 = arith.mulf %30, %32 : vector<8x128xf32>
    %34 = arith.addf %26, %33 : vector<8x128xf32>
    %c1_i32 = arith.constant 1 : i32
    %35 = tpu.dynamic_rotate %9 by %c1_i32 dim 1 : vector<8x128xf32>, i32 -> vector<8x128xf32>
    %36 = vector.extract_strided_slice %4 {offsets = [3, 0], sizes = [1, 128], strides = [1, 1]} : vector<9x128xf32> to vector<1x128xf32>
    %37 = vector.broadcast %36 : vector<1x128xf32> to vector<8x128xf32>
    %38 = arith.mulf %35, %37 : vector<8x128xf32>
    %39 = vector.extract_strided_slice %2 {offsets = [0, 3], sizes = [8, 1], strides = [1, 1]} : vector<8x9xf32> to vector<8x1xf32>
    %40 = vector.broadcast %39 : vector<8x1xf32> to vector<8x128xf32>
    %41 = arith.mulf %38, %40 : vector<8x128xf32>
    %42 = arith.addf %34, %41 : vector<8x128xf32>
    %43 = vector.extract_strided_slice %4 {offsets = [4, 0], sizes = [1, 128], strides = [1, 1]} : vector<9x128xf32> to vector<1x128xf32>
    %44 = vector.broadcast %43 : vector<1x128xf32> to vector<8x128xf32>
    %45 = arith.mulf %9, %44 : vector<8x128xf32>
    %46 = vector.extract_strided_slice %2 {offsets = [0, 4], sizes = [8, 1], strides = [1, 1]} : vector<8x9xf32> to vector<8x1xf32>
    %47 = vector.broadcast %46 : vector<8x1xf32> to vector<8x128xf32>
    %48 = arith.mulf %45, %47 : vector<8x128xf32>
    %49 = arith.addf %42, %48 : vector<8x128xf32>
    %c127_i32 = arith.constant 127 : i32
    %50 = tpu.dynamic_rotate %9 by %c127_i32 dim 1 : vector<8x128xf32>, i32 -> vector<8x128xf32>
    %51 = vector.extract_strided_slice %4 {offsets = [5, 0], sizes = [1, 128], strides = [1, 1]} : vector<9x128xf32> to vector<1x128xf32>
    %52 = vector.broadcast %51 : vector<1x128xf32> to vector<8x128xf32>
    %53 = arith.mulf %50, %52 : vector<8x128xf32>
    %54 = vector.extract_strided_slice %2 {offsets = [0, 5], sizes = [8, 1], strides = [1, 1]} : vector<8x9xf32> to vector<8x1xf32>
    %55 = vector.broadcast %54 : vector<8x1xf32> to vector<8x128xf32>
    %56 = arith.mulf %53, %55 : vector<8x128xf32>
    %57 = arith.addf %49, %56 : vector<8x128xf32>
    %c113_i32 = arith.constant 113 : i32
    %58 = tpu.dynamic_rotate %9 by %c113_i32 dim 1 : vector<8x128xf32>, i32 -> vector<8x128xf32>
    %59 = vector.extract_strided_slice %4 {offsets = [6, 0], sizes = [1, 128], strides = [1, 1]} : vector<9x128xf32> to vector<1x128xf32>
    %60 = vector.broadcast %59 : vector<1x128xf32> to vector<8x128xf32>
    %61 = arith.mulf %58, %60 : vector<8x128xf32>
    %62 = vector.extract_strided_slice %2 {offsets = [0, 6], sizes = [8, 1], strides = [1, 1]} : vector<8x9xf32> to vector<8x1xf32>
    %63 = vector.broadcast %62 : vector<8x1xf32> to vector<8x128xf32>
    %64 = arith.mulf %61, %63 : vector<8x128xf32>
    %65 = arith.addf %57, %64 : vector<8x128xf32>
    %c112_i32 = arith.constant 112 : i32
    %66 = tpu.dynamic_rotate %9 by %c112_i32 dim 1 : vector<8x128xf32>, i32 -> vector<8x128xf32>
    %67 = vector.extract_strided_slice %4 {offsets = [7, 0], sizes = [1, 128], strides = [1, 1]} : vector<9x128xf32> to vector<1x128xf32>
    %68 = vector.broadcast %67 : vector<1x128xf32> to vector<8x128xf32>
    %69 = arith.mulf %66, %68 : vector<8x128xf32>
    %70 = vector.extract_strided_slice %2 {offsets = [0, 7], sizes = [8, 1], strides = [1, 1]} : vector<8x9xf32> to vector<8x1xf32>
    %71 = vector.broadcast %70 : vector<8x1xf32> to vector<8x128xf32>
    %72 = arith.mulf %69, %71 : vector<8x128xf32>
    %73 = arith.addf %65, %72 : vector<8x128xf32>
    %c111_i32 = arith.constant 111 : i32
    %74 = tpu.dynamic_rotate %9 by %c111_i32 dim 1 : vector<8x128xf32>, i32 -> vector<8x128xf32>
    %75 = vector.extract_strided_slice %4 {offsets = [8, 0], sizes = [1, 128], strides = [1, 1]} : vector<9x128xf32> to vector<1x128xf32>
    %76 = vector.broadcast %75 : vector<1x128xf32> to vector<8x128xf32>
    %77 = arith.mulf %74, %76 : vector<8x128xf32>
    %78 = vector.extract_strided_slice %2 {offsets = [0, 8], sizes = [8, 1], strides = [1, 1]} : vector<8x9xf32> to vector<8x1xf32>
    %79 = vector.broadcast %78 : vector<8x1xf32> to vector<8x128xf32>
    %80 = arith.mulf %77, %79 : vector<8x128xf32>
    %81 = arith.addf %73, %80 : vector<8x128xf32>
    %82 = vector.broadcast %3 : vector<8x1xf32> to vector<8x128xf32>
    %83 = arith.addf %81, %82 : vector<8x128xf32>
    %84 = arith.truncf %83 : vector<8x128xf32> to vector<8x128xbf16>
    %c0_13 = arith.constant 0 : index
    %c0_14 = arith.constant 0 : index
    %c0_15 = arith.constant 0 : index
    %85 = vector.load %arg7[%c0_13, %c0_14, %c0_15] : memref<4x8x128xbf16, #tpu.memory_space<vmem>>, vector<1x8x128xbf16>
    %86 = vector.shape_cast %85 : vector<1x8x128xbf16> to vector<8x128xbf16>
    %87 = vector.shape_cast %84 : vector<8x128xbf16> to vector<1x8x128xbf16>
    tpu.vector_store %arg7[%c0_13, %c0_14, %c0_15], %87 {strides = array<i32>} : memref<4x8x128xbf16, #tpu.memory_space<vmem>>, vector<1x8x128xbf16>,
    %c1 = arith.constant 1 : index
    %c0_16 = arith.constant 0 : index
    %c0_17 = arith.constant 0 : index
    %88 = vector.load %arg1[%c1, %c0_16, %c0_17] : memref<4x8x128xbf16, #tpu.memory_space<vmem>>, vector<1x8x128xbf16>
    %89 = vector.shape_cast %88 : vector<1x8x128xbf16> to vector<8x128xbf16>
    %cst_18 = arith.constant dense<0.000000e+00> : vector<8x128xf32>
    %90 = tpu.matmul %0, %89, %cst_18 {dimension_numbers = #tpu.dot_dimension_numbers<[1], [0], [0], [1], [0, 0, 1, 1], [], []>} : vector<8x8xbf16>, vector<8x128xbf16>, vector<8x128xf32> -> vector<8x128xf32>
    %91 = vector.broadcast %1 : vector<8x1xf32> to vector<8x128xf32>
    %92 = arith.addf %90, %91 : vector<8x128xf32>
    %cst_19 = arith.constant 0.000000e+00 : f32
    %93 = vector.broadcast %cst_19 : f32 to vector<8x128xf32>
    %c17_i32_20 = arith.constant 17 : i32
    %94 = tpu.dynamic_rotate %92 by %c17_i32_20 dim 1 : vector<8x128xf32>, i32 -> vector<8x128xf32>
    %95 = vector.extract_strided_slice %4 {offsets = [0, 0], sizes = [1, 128], strides = [1, 1]} : vector<9x128xf32> to vector<1x128xf32>
    %96 = vector.broadcast %95 : vector<1x128xf32> to vector<8x128xf32>
    %97 = arith.mulf %94, %96 : vector<8x128xf32>
    %98 = vector.extract_strided_slice %2 {offsets = [0, 0], sizes = [8, 1], strides = [1, 1]} : vector<8x9xf32> to vector<8x1xf32>
    %99 = vector.broadcast %98 : vector<8x1xf32> to vector<8x128xf32>
    %100 = arith.mulf %97, %99 : vector<8x128xf32>
    %101 = arith.addf %93, %100 : vector<8x128xf32>
    %c16_i32_21 = arith.constant 16 : i32
    %102 = tpu.dynamic_rotate %92 by %c16_i32_21 dim 1 : vector<8x128xf32>, i32 -> vector<8x128xf32>
    %103 = vector.extract_strided_slice %4 {offsets = [1, 0], sizes = [1, 128], strides = [1, 1]} : vector<9x128xf32> to vector<1x128xf32>
    %104 = vector.broadcast %103 : vector<1x128xf32> to vector<8x128xf32>
    %105 = arith.mulf %102, %104 : vector<8x128xf32>
    %106 = vector.extract_strided_slice %2 {offsets = [0, 1], sizes = [8, 1], strides = [1, 1]} : vector<8x9xf32> to vector<8x1xf32>
    %107 = vector.broadcast %106 : vector<8x1xf32> to vector<8x128xf32>
    %108 = arith.mulf %105, %107 : vector<8x128xf32>
    %109 = arith.addf %101, %108 : vector<8x128xf32>
    %c15_i32_22 = arith.constant 15 : i32
    %110 = tpu.dynamic_rotate %92 by %c15_i32_22 dim 1 : vector<8x128xf32>, i32 -> vector<8x128xf32>
    %111 = vector.extract_strided_slice %4 {offsets = [2, 0], sizes = [1, 128], strides = [1, 1]} : vector<9x128xf32> to vector<1x128xf32>
    %112 = vector.broadcast %111 : vector<1x128xf32> to vector<8x128xf32>
    %113 = arith.mulf %110, %112 : vector<8x128xf32>
    %114 = vector.extract_strided_slice %2 {offsets = [0, 2], sizes = [8, 1], strides = [1, 1]} : vector<8x9xf32> to vector<8x1xf32>
    %115 = vector.broadcast %114 : vector<8x1xf32> to vector<8x128xf32>
    %116 = arith.mulf %113, %115 : vector<8x128xf32>
    %117 = arith.addf %109, %116 : vector<8x128xf32>
    %c1_i32_23 = arith.constant 1 : i32
    %118 = tpu.dynamic_rotate %92 by %c1_i32_23 dim 1 : vector<8x128xf32>, i32 -> vector<8x128xf32>
    %119 = vector.extract_strided_slice %4 {offsets = [3, 0], sizes = [1, 128], strides = [1, 1]} : vector<9x128xf32> to vector<1x128xf32>
    %120 = vector.broadcast %119 : vector<1x128xf32> to vector<8x128xf32>
    %121 = arith.mulf %118, %120 : vector<8x128xf32>
    %122 = vector.extract_strided_slice %2 {offsets = [0, 3], sizes = [8, 1], strides = [1, 1]} : vector<8x9xf32> to vector<8x1xf32>
    %123 = vector.broadcast %122 : vector<8x1xf32> to vector<8x128xf32>
    %124 = arith.mulf %121, %123 : vector<8x128xf32>
    %125 = arith.addf %117, %124 : vector<8x128xf32>
    %126 = vector.extract_strided_slice %4 {offsets = [4, 0], sizes = [1, 128], strides = [1, 1]} : vector<9x128xf32> to vector<1x128xf32>
    %127 = vector.broadcast %126 : vector<1x128xf32> to vector<8x128xf32>
    %128 = arith.mulf %92, %127 : vector<8x128xf32>
    %129 = vector.extract_strided_slice %2 {offsets = [0, 4], sizes = [8, 1], strides = [1, 1]} : vector<8x9xf32> to vector<8x1xf32>
    %130 = vector.broadcast %129 : vector<8x1xf32> to vector<8x128xf32>
    %131 = arith.mulf %128, %130 : vector<8x128xf32>
    %132 = arith.addf %125, %131 : vector<8x128xf32>
    %c127_i32_24 = arith.constant 127 : i32
    %133 = tpu.dynamic_rotate %92 by %c127_i32_24 dim 1 : vector<8x128xf32>, i32 -> vector<8x128xf32>
    %134 = vector.extract_strided_slice %4 {offsets = [5, 0], sizes = [1, 128], strides = [1, 1]} : vector<9x128xf32> to vector<1x128xf32>
    %135 = vector.broadcast %134 : vector<1x128xf32> to vector<8x128xf32>
    %136 = arith.mulf %133, %135 : vector<8x128xf32>
    %137 = vector.extract_strided_slice %2 {offsets = [0, 5], sizes = [8, 1], strides = [1, 1]} : vector<8x9xf32> to vector<8x1xf32>
    %138 = vector.broadcast %137 : vector<8x1xf32> to vector<8x128xf32>
    %139 = arith.mulf %136, %138 : vector<8x128xf32>
    %140 = arith.addf %132, %139 : vector<8x128xf32>
    %c113_i32_25 = arith.constant 113 : i32
    %141 = tpu.dynamic_rotate %92 by %c113_i32_25 dim 1 : vector<8x128xf32>, i32 -> vector<8x128xf32>
    %142 = vector.extract_strided_slice %4 {offsets = [6, 0], sizes = [1, 128], strides = [1, 1]} : vector<9x128xf32> to vector<1x128xf32>
    %143 = vector.broadcast %142 : vector<1x128xf32> to vector<8x128xf32>
    %144 = arith.mulf %141, %143 : vector<8x128xf32>
    %145 = vector.extract_strided_slice %2 {offsets = [0, 6], sizes = [8, 1], strides = [1, 1]} : vector<8x9xf32> to vector<8x1xf32>
    %146 = vector.broadcast %145 : vector<8x1xf32> to vector<8x128xf32>
    %147 = arith.mulf %144, %146 : vector<8x128xf32>
    %148 = arith.addf %140, %147 : vector<8x128xf32>
    %c112_i32_26 = arith.constant 112 : i32
    %149 = tpu.dynamic_rotate %92 by %c112_i32_26 dim 1 : vector<8x128xf32>, i32 -> vector<8x128xf32>
    %150 = vector.extract_strided_slice %4 {offsets = [7, 0], sizes = [1, 128], strides = [1, 1]} : vector<9x128xf32> to vector<1x128xf32>
    %151 = vector.broadcast %150 : vector<1x128xf32> to vector<8x128xf32>
    %152 = arith.mulf %149, %151 : vector<8x128xf32>
    %153 = vector.extract_strided_slice %2 {offsets = [0, 7], sizes = [8, 1], strides = [1, 1]} : vector<8x9xf32> to vector<8x1xf32>
    %154 = vector.broadcast %153 : vector<8x1xf32> to vector<8x128xf32>
    %155 = arith.mulf %152, %154 : vector<8x128xf32>
    %156 = arith.addf %148, %155 : vector<8x128xf32>
    %c111_i32_27 = arith.constant 111 : i32
    %157 = tpu.dynamic_rotate %92 by %c111_i32_27 dim 1 : vector<8x128xf32>, i32 -> vector<8x128xf32>
    %158 = vector.extract_strided_slice %4 {offsets = [8, 0], sizes = [1, 128], strides = [1, 1]} : vector<9x128xf32> to vector<1x128xf32>
    %159 = vector.broadcast %158 : vector<1x128xf32> to vector<8x128xf32>
    %160 = arith.mulf %157, %159 : vector<8x128xf32>
    %161 = vector.extract_strided_slice %2 {offsets = [0, 8], sizes = [8, 1], strides = [1, 1]} : vector<8x9xf32> to vector<8x1xf32>
    %162 = vector.broadcast %161 : vector<8x1xf32> to vector<8x128xf32>
    %163 = arith.mulf %160, %162 : vector<8x128xf32>
    %164 = arith.addf %156, %163 : vector<8x128xf32>
    %165 = vector.broadcast %3 : vector<8x1xf32> to vector<8x128xf32>
    %166 = arith.addf %164, %165 : vector<8x128xf32>
    %167 = arith.truncf %166 : vector<8x128xf32> to vector<8x128xbf16>
    %c1_28 = arith.constant 1 : index
    %c0_29 = arith.constant 0 : index
    %c0_30 = arith.constant 0 : index
    %168 = vector.load %arg7[%c1_28, %c0_29, %c0_30] : memref<4x8x128xbf16, #tpu.memory_space<vmem>>, vector<1x8x128xbf16>
    %169 = vector.shape_cast %168 : vector<1x8x128xbf16> to vector<8x128xbf16>
    %170 = vector.shape_cast %167 : vector<8x128xbf16> to vector<1x8x128xbf16>
    tpu.vector_store %arg7[%c1_28, %c0_29, %c0_30], %170 {strides = array<i32>} : memref<4x8x128xbf16, #tpu.memory_space<vmem>>, vector<1x8x128xbf16>,
    %c2 = arith.constant 2 : index
    %c0_31 = arith.constant 0 : index
    %c0_32 = arith.constant 0 : index
    %171 = vector.load %arg1[%c2, %c0_31, %c0_32] : memref<4x8x128xbf16, #tpu.memory_space<vmem>>, vector<1x8x128xbf16>
    %172 = vector.shape_cast %171 : vector<1x8x128xbf16> to vector<8x128xbf16>
    %cst_33 = arith.constant dense<0.000000e+00> : vector<8x128xf32>
    %173 = tpu.matmul %0, %172, %cst_33 {dimension_numbers = #tpu.dot_dimension_numbers<[1], [0], [0], [1], [0, 0, 1, 1], [], []>} : vector<8x8xbf16>, vector<8x128xbf16>, vector<8x128xf32> -> vector<8x128xf32>
    %174 = vector.broadcast %1 : vector<8x1xf32> to vector<8x128xf32>
    %175 = arith.addf %173, %174 : vector<8x128xf32>
    %cst_34 = arith.constant 0.000000e+00 : f32
    %176 = vector.broadcast %cst_34 : f32 to vector<8x128xf32>
    %c17_i32_35 = arith.constant 17 : i32
    %177 = tpu.dynamic_rotate %175 by %c17_i32_35 dim 1 : vector<8x128xf32>, i32 -> vector<8x128xf32>
    %178 = vector.extract_strided_slice %4 {offsets = [0, 0], sizes = [1, 128], strides = [1, 1]} : vector<9x128xf32> to vector<1x128xf32>
    %179 = vector.broadcast %178 : vector<1x128xf32> to vector<8x128xf32>
    %180 = arith.mulf %177, %179 : vector<8x128xf32>
    %181 = vector.extract_strided_slice %2 {offsets = [0, 0], sizes = [8, 1], strides = [1, 1]} : vector<8x9xf32> to vector<8x1xf32>
    %182 = vector.broadcast %181 : vector<8x1xf32> to vector<8x128xf32>
    %183 = arith.mulf %180, %182 : vector<8x128xf32>
    %184 = arith.addf %176, %183 : vector<8x128xf32>
    %c16_i32_36 = arith.constant 16 : i32
    %185 = tpu.dynamic_rotate %175 by %c16_i32_36 dim 1 : vector<8x128xf32>, i32 -> vector<8x128xf32>
    %186 = vector.extract_strided_slice %4 {offsets = [1, 0], sizes = [1, 128], strides = [1, 1]} : vector<9x128xf32> to vector<1x128xf32>
    %187 = vector.broadcast %186 : vector<1x128xf32> to vector<8x128xf32>
    %188 = arith.mulf %185, %187 : vector<8x128xf32>
    %189 = vector.extract_strided_slice %2 {offsets = [0, 1], sizes = [8, 1], strides = [1, 1]} : vector<8x9xf32> to vector<8x1xf32>
    %190 = vector.broadcast %189 : vector<8x1xf32> to vector<8x128xf32>
    %191 = arith.mulf %188, %190 : vector<8x128xf32>
    %192 = arith.addf %184, %191 : vector<8x128xf32>
    %c15_i32_37 = arith.constant 15 : i32
    %193 = tpu.dynamic_rotate %175 by %c15_i32_37 dim 1 : vector<8x128xf32>, i32 -> vector<8x128xf32>
    %194 = vector.extract_strided_slice %4 {offsets = [2, 0], sizes = [1, 128], strides = [1, 1]} : vector<9x128xf32> to vector<1x128xf32>
    %195 = vector.broadcast %194 : vector<1x128xf32> to vector<8x128xf32>
    %196 = arith.mulf %193, %195 : vector<8x128xf32>
    %197 = vector.extract_strided_slice %2 {offsets = [0, 2], sizes = [8, 1], strides = [1, 1]} : vector<8x9xf32> to vector<8x1xf32>
    %198 = vector.broadcast %197 : vector<8x1xf32> to vector<8x128xf32>
    %199 = arith.mulf %196, %198 : vector<8x128xf32>
    %200 = arith.addf %192, %199 : vector<8x128xf32>
    %c1_i32_38 = arith.constant 1 : i32
    %201 = tpu.dynamic_rotate %175 by %c1_i32_38 dim 1 : vector<8x128xf32>, i32 -> vector<8x128xf32>
    %202 = vector.extract_strided_slice %4 {offsets = [3, 0], sizes = [1, 128], strides = [1, 1]} : vector<9x128xf32> to vector<1x128xf32>
    %203 = vector.broadcast %202 : vector<1x128xf32> to vector<8x128xf32>
    %204 = arith.mulf %201, %203 : vector<8x128xf32>
    %205 = vector.extract_strided_slice %2 {offsets = [0, 3], sizes = [8, 1], strides = [1, 1]} : vector<8x9xf32> to vector<8x1xf32>
    %206 = vector.broadcast %205 : vector<8x1xf32> to vector<8x128xf32>
    %207 = arith.mulf %204, %206 : vector<8x128xf32>
    %208 = arith.addf %200, %207 : vector<8x128xf32>
    %209 = vector.extract_strided_slice %4 {offsets = [4, 0], sizes = [1, 128], strides = [1, 1]} : vector<9x128xf32> to vector<1x128xf32>
    %210 = vector.broadcast %209 : vector<1x128xf32> to vector<8x128xf32>
    %211 = arith.mulf %175, %210 : vector<8x128xf32>
    %212 = vector.extract_strided_slice %2 {offsets = [0, 4], sizes = [8, 1], strides = [1, 1]} : vector<8x9xf32> to vector<8x1xf32>
    %213 = vector.broadcast %212 : vector<8x1xf32> to vector<8x128xf32>
    %214 = arith.mulf %211, %213 : vector<8x128xf32>
    %215 = arith.addf %208, %214 : vector<8x128xf32>
    %c127_i32_39 = arith.constant 127 : i32
    %216 = tpu.dynamic_rotate %175 by %c127_i32_39 dim 1 : vector<8x128xf32>, i32 -> vector<8x128xf32>
    %217 = vector.extract_strided_slice %4 {offsets = [5, 0], sizes = [1, 128], strides = [1, 1]} : vector<9x128xf32> to vector<1x128xf32>
    %218 = vector.broadcast %217 : vector<1x128xf32> to vector<8x128xf32>
    %219 = arith.mulf %216, %218 : vector<8x128xf32>
    %220 = vector.extract_strided_slice %2 {offsets = [0, 5], sizes = [8, 1], strides = [1, 1]} : vector<8x9xf32> to vector<8x1xf32>
    %221 = vector.broadcast %220 : vector<8x1xf32> to vector<8x128xf32>
    %222 = arith.mulf %219, %221 : vector<8x128xf32>
    %223 = arith.addf %215, %222 : vector<8x128xf32>
    %c113_i32_40 = arith.constant 113 : i32
    %224 = tpu.dynamic_rotate %175 by %c113_i32_40 dim 1 : vector<8x128xf32>, i32 -> vector<8x128xf32>
    %225 = vector.extract_strided_slice %4 {offsets = [6, 0], sizes = [1, 128], strides = [1, 1]} : vector<9x128xf32> to vector<1x128xf32>
    %226 = vector.broadcast %225 : vector<1x128xf32> to vector<8x128xf32>
    %227 = arith.mulf %224, %226 : vector<8x128xf32>
    %228 = vector.extract_strided_slice %2 {offsets = [0, 6], sizes = [8, 1], strides = [1, 1]} : vector<8x9xf32> to vector<8x1xf32>
    %229 = vector.broadcast %228 : vector<8x1xf32> to vector<8x128xf32>
    %230 = arith.mulf %227, %229 : vector<8x128xf32>
    %231 = arith.addf %223, %230 : vector<8x128xf32>
    %c112_i32_41 = arith.constant 112 : i32
    %232 = tpu.dynamic_rotate %175 by %c112_i32_41 dim 1 : vector<8x128xf32>, i32 -> vector<8x128xf32>
    %233 = vector.extract_strided_slice %4 {offsets = [7, 0], sizes = [1, 128], strides = [1, 1]} : vector<9x128xf32> to vector<1x128xf32>
    %234 = vector.broadcast %233 : vector<1x128xf32> to vector<8x128xf32>
    %235 = arith.mulf %232, %234 : vector<8x128xf32>
    %236 = vector.extract_strided_slice %2 {offsets = [0, 7], sizes = [8, 1], strides = [1, 1]} : vector<8x9xf32> to vector<8x1xf32>
    %237 = vector.broadcast %236 : vector<8x1xf32> to vector<8x128xf32>
    %238 = arith.mulf %235, %237 : vector<8x128xf32>
    %239 = arith.addf %231, %238 : vector<8x128xf32>
    %c111_i32_42 = arith.constant 111 : i32
    %240 = tpu.dynamic_rotate %175 by %c111_i32_42 dim 1 : vector<8x128xf32>, i32 -> vector<8x128xf32>
    %241 = vector.extract_strided_slice %4 {offsets = [8, 0], sizes = [1, 128], strides = [1, 1]} : vector<9x128xf32> to vector<1x128xf32>
    %242 = vector.broadcast %241 : vector<1x128xf32> to vector<8x128xf32>
    %243 = arith.mulf %240, %242 : vector<8x128xf32>
    %244 = vector.extract_strided_slice %2 {offsets = [0, 8], sizes = [8, 1], strides = [1, 1]} : vector<8x9xf32> to vector<8x1xf32>
    %245 = vector.broadcast %244 : vector<8x1xf32> to vector<8x128xf32>
    %246 = arith.mulf %243, %245 : vector<8x128xf32>
    %247 = arith.addf %239, %246 : vector<8x128xf32>
    %248 = vector.broadcast %3 : vector<8x1xf32> to vector<8x128xf32>
    %249 = arith.addf %247, %248 : vector<8x128xf32>
    %250 = arith.truncf %249 : vector<8x128xf32> to vector<8x128xbf16>
    %c2_43 = arith.constant 2 : index
    %c0_44 = arith.constant 0 : index
    %c0_45 = arith.constant 0 : index
    %251 = vector.load %arg7[%c2_43, %c0_44, %c0_45] : memref<4x8x128xbf16, #tpu.memory_space<vmem>>, vector<1x8x128xbf16>
    %252 = vector.shape_cast %251 : vector<1x8x128xbf16> to vector<8x128xbf16>
    %253 = vector.shape_cast %250 : vector<8x128xbf16> to vector<1x8x128xbf16>
    tpu.vector_store %arg7[%c2_43, %c0_44, %c0_45], %253 {strides = array<i32>} : memref<4x8x128xbf16, #tpu.memory_space<vmem>>, vector<1x8x128xbf16>,
    %c3 = arith.constant 3 : index
    %c0_46 = arith.constant 0 : index
    %c0_47 = arith.constant 0 : index
    %254 = vector.load %arg1[%c3, %c0_46, %c0_47] : memref<4x8x128xbf16, #tpu.memory_space<vmem>>, vector<1x8x128xbf16>
    %255 = vector.shape_cast %254 : vector<1x8x128xbf16> to vector<8x128xbf16>
    %cst_48 = arith.constant dense<0.000000e+00> : vector<8x128xf32>
    %256 = tpu.matmul %0, %255, %cst_48 {dimension_numbers = #tpu.dot_dimension_numbers<[1], [0], [0], [1], [0, 0, 1, 1], [], []>} : vector<8x8xbf16>, vector<8x128xbf16>, vector<8x128xf32> -> vector<8x128xf32>
    %257 = vector.broadcast %1 : vector<8x1xf32> to vector<8x128xf32>
    %258 = arith.addf %256, %257 : vector<8x128xf32>
    %cst_49 = arith.constant 0.000000e+00 : f32
    %259 = vector.broadcast %cst_49 : f32 to vector<8x128xf32>
    %c17_i32_50 = arith.constant 17 : i32
    %260 = tpu.dynamic_rotate %258 by %c17_i32_50 dim 1 : vector<8x128xf32>, i32 -> vector<8x128xf32>
    %261 = vector.extract_strided_slice %4 {offsets = [0, 0], sizes = [1, 128], strides = [1, 1]} : vector<9x128xf32> to vector<1x128xf32>
    %262 = vector.broadcast %261 : vector<1x128xf32> to vector<8x128xf32>
    %263 = arith.mulf %260, %262 : vector<8x128xf32>
    %264 = vector.extract_strided_slice %2 {offsets = [0, 0], sizes = [8, 1], strides = [1, 1]} : vector<8x9xf32> to vector<8x1xf32>
    %265 = vector.broadcast %264 : vector<8x1xf32> to vector<8x128xf32>
    %266 = arith.mulf %263, %265 : vector<8x128xf32>
    %267 = arith.addf %259, %266 : vector<8x128xf32>
    %c16_i32_51 = arith.constant 16 : i32
    %268 = tpu.dynamic_rotate %258 by %c16_i32_51 dim 1 : vector<8x128xf32>, i32 -> vector<8x128xf32>
    %269 = vector.extract_strided_slice %4 {offsets = [1, 0], sizes = [1, 128], strides = [1, 1]} : vector<9x128xf32> to vector<1x128xf32>
    %270 = vector.broadcast %269 : vector<1x128xf32> to vector<8x128xf32>
    %271 = arith.mulf %268, %270 : vector<8x128xf32>
    %272 = vector.extract_strided_slice %2 {offsets = [0, 1], sizes = [8, 1], strides = [1, 1]} : vector<8x9xf32> to vector<8x1xf32>
    %273 = vector.broadcast %272 : vector<8x1xf32> to vector<8x128xf32>
    %274 = arith.mulf %271, %273 : vector<8x128xf32>
    %275 = arith.addf %267, %274 : vector<8x128xf32>
    %c15_i32_52 = arith.constant 15 : i32
    %276 = tpu.dynamic_rotate %258 by %c15_i32_52 dim 1 : vector<8x128xf32>, i32 -> vector<8x128xf32>
    %277 = vector.extract_strided_slice %4 {offsets = [2, 0], sizes = [1, 128], strides = [1, 1]} : vector<9x128xf32> to vector<1x128xf32>
    %278 = vector.broadcast %277 : vector<1x128xf32> to vector<8x128xf32>
    %279 = arith.mulf %276, %278 : vector<8x128xf32>
    %280 = vector.extract_strided_slice %2 {offsets = [0, 2], sizes = [8, 1], strides = [1, 1]} : vector<8x9xf32> to vector<8x1xf32>
    %281 = vector.broadcast %280 : vector<8x1xf32> to vector<8x128xf32>
    %282 = arith.mulf %279, %281 : vector<8x128xf32>
    %283 = arith.addf %275, %282 : vector<8x128xf32>
    %c1_i32_53 = arith.constant 1 : i32
    %284 = tpu.dynamic_rotate %258 by %c1_i32_53 dim 1 : vector<8x128xf32>, i32 -> vector<8x128xf32>
    %285 = vector.extract_strided_slice %4 {offsets = [3, 0], sizes = [1, 128], strides = [1, 1]} : vector<9x128xf32> to vector<1x128xf32>
    %286 = vector.broadcast %285 : vector<1x128xf32> to vector<8x128xf32>
    %287 = arith.mulf %284, %286 : vector<8x128xf32>
    %288 = vector.extract_strided_slice %2 {offsets = [0, 3], sizes = [8, 1], strides = [1, 1]} : vector<8x9xf32> to vector<8x1xf32>
    %289 = vector.broadcast %288 : vector<8x1xf32> to vector<8x128xf32>
    %290 = arith.mulf %287, %289 : vector<8x128xf32>
    %291 = arith.addf %283, %290 : vector<8x128xf32>
    %292 = vector.extract_strided_slice %4 {offsets = [4, 0], sizes = [1, 128], strides = [1, 1]} : vector<9x128xf32> to vector<1x128xf32>
    %293 = vector.broadcast %292 : vector<1x128xf32> to vector<8x128xf32>
    %294 = arith.mulf %258, %293 : vector<8x128xf32>
    %295 = vector.extract_strided_slice %2 {offsets = [0, 4], sizes = [8, 1], strides = [1, 1]} : vector<8x9xf32> to vector<8x1xf32>
    %296 = vector.broadcast %295 : vector<8x1xf32> to vector<8x128xf32>
    %297 = arith.mulf %294, %296 : vector<8x128xf32>
    %298 = arith.addf %291, %297 : vector<8x128xf32>
    %c127_i32_54 = arith.constant 127 : i32
    %299 = tpu.dynamic_rotate %258 by %c127_i32_54 dim 1 : vector<8x128xf32>, i32 -> vector<8x128xf32>
    %300 = vector.extract_strided_slice %4 {offsets = [5, 0], sizes = [1, 128], strides = [1, 1]} : vector<9x128xf32> to vector<1x128xf32>
    %301 = vector.broadcast %300 : vector<1x128xf32> to vector<8x128xf32>
    %302 = arith.mulf %299, %301 : vector<8x128xf32>
    %303 = vector.extract_strided_slice %2 {offsets = [0, 5], sizes = [8, 1], strides = [1, 1]} : vector<8x9xf32> to vector<8x1xf32>
    %304 = vector.broadcast %303 : vector<8x1xf32> to vector<8x128xf32>
    %305 = arith.mulf %302, %304 : vector<8x128xf32>
    %306 = arith.addf %298, %305 : vector<8x128xf32>
    %c113_i32_55 = arith.constant 113 : i32
    %307 = tpu.dynamic_rotate %258 by %c113_i32_55 dim 1 : vector<8x128xf32>, i32 -> vector<8x128xf32>
    %308 = vector.extract_strided_slice %4 {offsets = [6, 0], sizes = [1, 128], strides = [1, 1]} : vector<9x128xf32> to vector<1x128xf32>
    %309 = vector.broadcast %308 : vector<1x128xf32> to vector<8x128xf32>
    %310 = arith.mulf %307, %309 : vector<8x128xf32>
    %311 = vector.extract_strided_slice %2 {offsets = [0, 6], sizes = [8, 1], strides = [1, 1]} : vector<8x9xf32> to vector<8x1xf32>
    %312 = vector.broadcast %311 : vector<8x1xf32> to vector<8x128xf32>
    %313 = arith.mulf %310, %312 : vector<8x128xf32>
    %314 = arith.addf %306, %313 : vector<8x128xf32>
    %c112_i32_56 = arith.constant 112 : i32
    %315 = tpu.dynamic_rotate %258 by %c112_i32_56 dim 1 : vector<8x128xf32>, i32 -> vector<8x128xf32>
    %316 = vector.extract_strided_slice %4 {offsets = [7, 0], sizes = [1, 128], strides = [1, 1]} : vector<9x128xf32> to vector<1x128xf32>
    %317 = vector.broadcast %316 : vector<1x128xf32> to vector<8x128xf32>
    %318 = arith.mulf %315, %317 : vector<8x128xf32>
    %319 = vector.extract_strided_slice %2 {offsets = [0, 7], sizes = [8, 1], strides = [1, 1]} : vector<8x9xf32> to vector<8x1xf32>
    %320 = vector.broadcast %319 : vector<8x1xf32> to vector<8x128xf32>
    %321 = arith.mulf %318, %320 : vector<8x128xf32>
    %322 = arith.addf %314, %321 : vector<8x128xf32>
    %c111_i32_57 = arith.constant 111 : i32
    %323 = tpu.dynamic_rotate %258 by %c111_i32_57 dim 1 : vector<8x128xf32>, i32 -> vector<8x128xf32>
    %324 = vector.extract_strided_slice %4 {offsets = [8, 0], sizes = [1, 128], strides = [1, 1]} : vector<9x128xf32> to vector<1x128xf32>
    %325 = vector.broadcast %324 : vector<1x128xf32> to vector<8x128xf32>
    %326 = arith.mulf %323, %325 : vector<8x128xf32>
    %327 = vector.extract_strided_slice %2 {offsets = [0, 8], sizes = [8, 1], strides = [1, 1]} : vector<8x9xf32> to vector<8x1xf32>
    %328 = vector.broadcast %327 : vector<8x1xf32> to vector<8x128xf32>
    %329 = arith.mulf %326, %328 : vector<8x128xf32>
    %330 = arith.addf %322, %329 : vector<8x128xf32>
    %331 = vector.broadcast %3 : vector<8x1xf32> to vector<8x128xf32>
    %332 = arith.addf %330, %331 : vector<8x128xf32>
    %333 = arith.truncf %332 : vector<8x128xf32> to vector<8x128xbf16>
    %c3_58 = arith.constant 3 : index
    %c0_59 = arith.constant 0 : index
    %c0_60 = arith.constant 0 : index
    %334 = vector.load %arg7[%c3_58, %c0_59, %c0_60] : memref<4x8x128xbf16, #tpu.memory_space<vmem>>, vector<1x8x128xbf16>
    %335 = vector.shape_cast %334 : vector<1x8x128xbf16> to vector<8x128xbf16>
    %336 = vector.shape_cast %333 : vector<8x128xbf16> to vector<1x8x128xbf16>
    tpu.vector_store %arg7[%c3_58, %c0_59, %c0_60], %336 {strides = array<i32>} : memref<4x8x128xbf16, #tpu.memory_space<vmem>>, vector<1x8x128xbf16>,
    return
  }
  func.func @transform_0(%arg0: i32) -> (i32, i32, i32) {
    %c0_i32 = arith.constant 0 : i32
    %c0_i32_0 = arith.constant 0 : i32
    %c0_i32_1 = arith.constant 0 : i32
    return %arg0, %c0_i32, %c0_i32_0 : i32, i32, i32
  }
  func.func @transform_1(%arg0: i32) -> (i32, i32) {
    %c0_i32 = arith.constant 0 : i32
    %c0_i32_0 = arith.constant 0 : i32
    %c0_i32_1 = arith.constant 0 : i32
    return %c0_i32, %c0_i32_0 : i32, i32
  }
  func.func @transform_2(%arg0: i32) -> (i32, i32) {
    %c0_i32 = arith.constant 0 : i32
    %c0_i32_0 = arith.constant 0 : i32
    %c0_i32_1 = arith.constant 0 : i32
    return %c0_i32, %c0_i32_0 : i32, i32
  }
  func.func @transform_3(%arg0: i32) -> (i32, i32) {
    %c0_i32 = arith.constant 0 : i32
    %c0_i32_0 = arith.constant 0 : i32
    %c0_i32_1 = arith.constant 0 : i32
    return %c0_i32, %c0_i32_0 : i32, i32
  }
  func.func @transform_4(%arg0: i32) -> (i32, i32) {
    %c0_i32 = arith.constant 0 : i32
    %c0_i32_0 = arith.constant 0 : i32
    %c0_i32_1 = arith.constant 0 : i32
    return %c0_i32, %c0_i32_0 : i32, i32
  }
  func.func @transform_5(%arg0: i32) -> (i32, i32) {
    %c0_i32 = arith.constant 0 : i32
    %c0_i32_0 = arith.constant 0 : i32
    %c0_i32_1 = arith.constant 0 : i32
    return %c0_i32, %c0_i32_0 : i32, i32
  }
  func.func @transform_6(%arg0: i32) -> (i32, i32, i32) {
    %c0_i32 = arith.constant 0 : i32
    %c0_i32_0 = arith.constant 0 : i32
    %c0_i32_1 = arith.constant 0 : i32
    return %arg0, %c0_i32, %c0_i32_0 : i32, i32, i32
  }
}

module attributes {stable_mosaic.version = 11 : i64} {
  func.func @_attn_out_kernel(%arg0: i32, %arg1: memref<2x8x128xbf16, #tpu.memory_space<vmem>>, %arg2: memref<2x8x128xbf16, #tpu.memory_space<vmem>>, %arg3: memref<2x8x128xbf16, #tpu.memory_space<vmem>>, %arg4: memref<8x1xf32, #tpu.memory_space<vmem>>, %arg5: memref<8x16xf32, #tpu.memory_space<vmem>>, %arg6: memref<8x8xbf16, #tpu.memory_space<vmem>>, %arg7: memref<8x1xf32, #tpu.memory_space<vmem>>, %arg8: memref<2x8x128xf32, #tpu.memory_space<vmem>>) attributes {dimension_semantics = [#tpu.dimension_semantics<parallel>], iteration_bounds = array<i64: 2>, scalar_prefetch = 0 : i64, scratch_operands = 0 : i64, tpu.core_type = #tpu.core_type<tc>, window_params = [{transform_indices = @transform_0, window_bounds = array<i64: 2, 8, 128>}, {transform_indices = @transform_1, window_bounds = array<i64: 2, 8, 128>}, {transform_indices = @transform_2, window_bounds = array<i64: 2, 8, 128>}, {pipeline_mode = #tpu.pipeline_mode<synchronous>, transform_indices = @transform_3, window_bounds = array<i64: 8, 1>}, {pipeline_mode = #tpu.pipeline_mode<synchronous>, transform_indices = @transform_4, window_bounds = array<i64: 8, 16>}, {pipeline_mode = #tpu.pipeline_mode<synchronous>, transform_indices = @transform_5, window_bounds = array<i64: 8, 8>}, {pipeline_mode = #tpu.pipeline_mode<synchronous>, transform_indices = @transform_6, window_bounds = array<i64: 8, 1>}, {transform_indices = @transform_7, window_bounds = array<i64: 2, 8, 128>}]} {
    %c0 = arith.constant 0 : index
    %c0_0 = arith.constant 0 : index
    %c0_1 = arith.constant 0 : index
    %0 = vector.load %arg2[%c0, %c0_0, %c0_1] : memref<2x8x128xbf16, #tpu.memory_space<vmem>>, vector<1x8x128xbf16>
    %1 = vector.shape_cast %0 : vector<1x8x128xbf16> to vector<8x128xbf16>
    %2 = arith.extf %1 : vector<8x128xbf16> to vector<8x128xf32>
    %3 = arith.mulf %2, %2 : vector<8x128xf32>
    %cst = arith.constant dense<0.000000e+00> : vector<8xf32>
    %4 = vector.multi_reduction <add>, %3, %cst [1] : vector<8x128xf32> to vector<8xf32>
    %5 = vector.shape_cast %4 : vector<8xf32> to vector<8x1xf32>
    %cst_2 = arith.constant 1.000000e-24 : f32
    %6 = vector.broadcast %cst_2 : f32 to vector<8x1xf32>
    %7 = arith.maximumf %5, %6 : vector<8x1xf32>
    %8 = math.rsqrt %7 : vector<8x1xf32>
    %9 = vector.broadcast %8 : vector<8x1xf32> to vector<8x128xf32>
    %10 = arith.mulf %2, %9 : vector<8x128xf32>
    %c0_3 = arith.constant 0 : index
    %c0_4 = arith.constant 0 : index
    %c0_5 = arith.constant 0 : index
    %11 = vector.load %arg3[%c0_3, %c0_4, %c0_5] : memref<2x8x128xbf16, #tpu.memory_space<vmem>>, vector<1x8x128xbf16>
    %12 = vector.shape_cast %11 : vector<1x8x128xbf16> to vector<8x128xbf16>
    %c1 = arith.constant 1 : index
    %c0_6 = arith.constant 0 : index
    %c0_7 = arith.constant 0 : index
    %13 = vector.load %arg2[%c1, %c0_6, %c0_7] : memref<2x8x128xbf16, #tpu.memory_space<vmem>>, vector<1x8x128xbf16>
    %14 = vector.shape_cast %13 : vector<1x8x128xbf16> to vector<8x128xbf16>
    %15 = arith.extf %14 : vector<8x128xbf16> to vector<8x128xf32>
    %16 = arith.mulf %15, %15 : vector<8x128xf32>
    %cst_8 = arith.constant dense<0.000000e+00> : vector<8xf32>
    %17 = vector.multi_reduction <add>, %16, %cst_8 [1] : vector<8x128xf32> to vector<8xf32>
    %18 = vector.shape_cast %17 : vector<8xf32> to vector<8x1xf32>
    %cst_9 = arith.constant 1.000000e-24 : f32
    %19 = vector.broadcast %cst_9 : f32 to vector<8x1xf32>
    %20 = arith.maximumf %18, %19 : vector<8x1xf32>
    %21 = math.rsqrt %20 : vector<8x1xf32>
    %22 = vector.broadcast %21 : vector<8x1xf32> to vector<8x128xf32>
    %23 = arith.mulf %15, %22 : vector<8x128xf32>
    %c1_10 = arith.constant 1 : index
    %c0_11 = arith.constant 0 : index
    %c0_12 = arith.constant 0 : index
    %24 = vector.load %arg3[%c1_10, %c0_11, %c0_12] : memref<2x8x128xbf16, #tpu.memory_space<vmem>>, vector<1x8x128xbf16>
    %25 = vector.shape_cast %24 : vector<1x8x128xbf16> to vector<8x128xbf16>
    %26 = tpu.concatenate %10, %23 in 0 : vector<8x128xf32>, vector<8x128xf32> -> vector<16x128xf32>
    %27 = arith.truncf %26 : vector<16x128xf32> to vector<16x128xbf16>
    %28 = tpu.concatenate %12, %25 in 0 : vector<8x128xbf16>, vector<8x128xbf16> -> vector<16x128xbf16>
    %c0_13 = arith.constant 0 : index
    %c0_14 = arith.constant 0 : index
    %29 = vector.load %arg4[%c0_13, %c0_14] : memref<8x1xf32, #tpu.memory_space<vmem>>, vector<8x1xf32>
    %c0_15 = arith.constant 0 : index
    %c0_16 = arith.constant 0 : index
    %30 = vector.load %arg5[%c0_15, %c0_16] : memref<8x16xf32, #tpu.memory_space<vmem>>, vector<8x16xf32>
    %c0_17 = arith.constant 0 : index
    %c0_18 = arith.constant 0 : index
    %31 = vector.load %arg6[%c0_17, %c0_18] : memref<8x8xbf16, #tpu.memory_space<vmem>>, vector<8x8xbf16>
    %c0_19 = arith.constant 0 : index
    %c0_20 = arith.constant 0 : index
    %32 = vector.load %arg7[%c0_19, %c0_20] : memref<8x1xf32, #tpu.memory_space<vmem>>, vector<8x1xf32>
    %c0_21 = arith.constant 0 : index
    %c0_22 = arith.constant 0 : index
    %c0_23 = arith.constant 0 : index
    %33 = vector.load %arg1[%c0_21, %c0_22, %c0_23] : memref<2x8x128xbf16, #tpu.memory_space<vmem>>, vector<1x8x128xbf16>
    %34 = vector.shape_cast %33 : vector<1x8x128xbf16> to vector<8x128xbf16>
    %35 = arith.extf %34 : vector<8x128xbf16> to vector<8x128xf32>
    %36 = arith.mulf %35, %35 : vector<8x128xf32>
    %cst_24 = arith.constant dense<0.000000e+00> : vector<8xf32>
    %37 = vector.multi_reduction <add>, %36, %cst_24 [1] : vector<8x128xf32> to vector<8xf32>
    %38 = vector.shape_cast %37 : vector<8xf32> to vector<8x1xf32>
    %cst_25 = arith.constant 1.000000e-24 : f32
    %39 = vector.broadcast %cst_25 : f32 to vector<8x1xf32>
    %40 = arith.maximumf %38, %39 : vector<8x1xf32>
    %41 = math.rsqrt %40 : vector<8x1xf32>
    %42 = vector.broadcast %41 : vector<8x1xf32> to vector<8x128xf32>
    %43 = arith.mulf %35, %42 : vector<8x128xf32>
    %44 = arith.truncf %43 : vector<8x128xf32> to vector<8x128xbf16>
    %cst_26 = arith.constant dense<0.000000e+00> : vector<8x16xf32>
    %45 = tpu.matmul %44, %27, %cst_26 {dimension_numbers = #tpu.dot_dimension_numbers<[1], [1], [0], [0], [0, 0, 1, 0], [], []>} : vector<8x128xbf16>, vector<16x128xbf16>, vector<8x16xf32> -> vector<8x16xf32>
    %46 = vector.broadcast %29 : vector<8x1xf32> to vector<8x16xf32>
    %47 = arith.mulf %45, %46 : vector<8x16xf32>
    %48 = arith.addf %47, %30 : vector<8x16xf32>
    %cst_27 = arith.constant dense<0xFF800000> : vector<8xf32>
    %49 = vector.multi_reduction <maximumf>, %48, %cst_27 [1] : vector<8x16xf32> to vector<8xf32>
    %50 = vector.shape_cast %49 : vector<8xf32> to vector<8x1xf32>
    %51 = vector.broadcast %50 : vector<8x1xf32> to vector<8x16xf32>
    %52 = arith.subf %48, %51 : vector<8x16xf32>
    %53 = math.exp %52 : vector<8x16xf32>
    %cst_28 = arith.constant dense<0.000000e+00> : vector<8xf32>
    %54 = vector.multi_reduction <add>, %53, %cst_28 [1] : vector<8x16xf32> to vector<8xf32>
    %55 = vector.shape_cast %54 : vector<8xf32> to vector<8x1xf32>
    %56 = tpu.reciprocal %55 {approx = true} : vector<8x1xf32> -> vector<8x1xf32>
    %57 = vector.broadcast %56 : vector<8x1xf32> to vector<8x16xf32>
    %58 = arith.mulf %53, %57 : vector<8x16xf32>
    %59 = arith.truncf %58 : vector<8x16xf32> to vector<8x16xbf16>
    %cst_29 = arith.constant dense<0.000000e+00> : vector<8x128xf32>
    %60 = tpu.matmul %59, %28, %cst_29 {dimension_numbers = #tpu.dot_dimension_numbers<[1], [0], [0], [1], [0, 0, 1, 1], [], []>} : vector<8x16xbf16>, vector<16x128xbf16>, vector<8x128xf32> -> vector<8x128xf32>
    %61 = arith.truncf %60 : vector<8x128xf32> to vector<8x128xbf16>
    %cst_30 = arith.constant dense<0.000000e+00> : vector<8x128xf32>
    %62 = tpu.matmul %31, %61, %cst_30 {dimension_numbers = #tpu.dot_dimension_numbers<[1], [0], [0], [1], [0, 0, 1, 1], [], []>} : vector<8x8xbf16>, vector<8x128xbf16>, vector<8x128xf32> -> vector<8x128xf32>
    %63 = vector.broadcast %32 : vector<8x1xf32> to vector<8x128xf32>
    %64 = arith.addf %62, %63 : vector<8x128xf32>
    %c0_31 = arith.constant 0 : index
    %c0_32 = arith.constant 0 : index
    %c0_33 = arith.constant 0 : index
    %65 = vector.load %arg8[%c0_31, %c0_32, %c0_33] : memref<2x8x128xf32, #tpu.memory_space<vmem>>, vector<1x8x128xf32>
    %66 = vector.shape_cast %65 : vector<1x8x128xf32> to vector<8x128xf32>
    %67 = vector.shape_cast %64 : vector<8x128xf32> to vector<1x8x128xf32>
    tpu.vector_store %arg8[%c0_31, %c0_32, %c0_33], %67 {strides = array<i32>} : memref<2x8x128xf32, #tpu.memory_space<vmem>>, vector<1x8x128xf32>,
    %c1_34 = arith.constant 1 : index
    %c0_35 = arith.constant 0 : index
    %c0_36 = arith.constant 0 : index
    %68 = vector.load %arg1[%c1_34, %c0_35, %c0_36] : memref<2x8x128xbf16, #tpu.memory_space<vmem>>, vector<1x8x128xbf16>
    %69 = vector.shape_cast %68 : vector<1x8x128xbf16> to vector<8x128xbf16>
    %70 = arith.extf %69 : vector<8x128xbf16> to vector<8x128xf32>
    %71 = arith.mulf %70, %70 : vector<8x128xf32>
    %cst_37 = arith.constant dense<0.000000e+00> : vector<8xf32>
    %72 = vector.multi_reduction <add>, %71, %cst_37 [1] : vector<8x128xf32> to vector<8xf32>
    %73 = vector.shape_cast %72 : vector<8xf32> to vector<8x1xf32>
    %cst_38 = arith.constant 1.000000e-24 : f32
    %74 = vector.broadcast %cst_38 : f32 to vector<8x1xf32>
    %75 = arith.maximumf %73, %74 : vector<8x1xf32>
    %76 = math.rsqrt %75 : vector<8x1xf32>
    %77 = vector.broadcast %76 : vector<8x1xf32> to vector<8x128xf32>
    %78 = arith.mulf %70, %77 : vector<8x128xf32>
    %79 = arith.truncf %78 : vector<8x128xf32> to vector<8x128xbf16>
    %cst_39 = arith.constant dense<0.000000e+00> : vector<8x16xf32>
    %80 = tpu.matmul %79, %27, %cst_39 {dimension_numbers = #tpu.dot_dimension_numbers<[1], [1], [0], [0], [0, 0, 1, 0], [], []>} : vector<8x128xbf16>, vector<16x128xbf16>, vector<8x16xf32> -> vector<8x16xf32>
    %81 = vector.broadcast %29 : vector<8x1xf32> to vector<8x16xf32>
    %82 = arith.mulf %80, %81 : vector<8x16xf32>
    %83 = arith.addf %82, %30 : vector<8x16xf32>
    %cst_40 = arith.constant dense<0xFF800000> : vector<8xf32>
    %84 = vector.multi_reduction <maximumf>, %83, %cst_40 [1] : vector<8x16xf32> to vector<8xf32>
    %85 = vector.shape_cast %84 : vector<8xf32> to vector<8x1xf32>
    %86 = vector.broadcast %85 : vector<8x1xf32> to vector<8x16xf32>
    %87 = arith.subf %83, %86 : vector<8x16xf32>
    %88 = math.exp %87 : vector<8x16xf32>
    %cst_41 = arith.constant dense<0.000000e+00> : vector<8xf32>
    %89 = vector.multi_reduction <add>, %88, %cst_41 [1] : vector<8x16xf32> to vector<8xf32>
    %90 = vector.shape_cast %89 : vector<8xf32> to vector<8x1xf32>
    %91 = tpu.reciprocal %90 {approx = true} : vector<8x1xf32> -> vector<8x1xf32>
    %92 = vector.broadcast %91 : vector<8x1xf32> to vector<8x16xf32>
    %93 = arith.mulf %88, %92 : vector<8x16xf32>
    %94 = arith.truncf %93 : vector<8x16xf32> to vector<8x16xbf16>
    %cst_42 = arith.constant dense<0.000000e+00> : vector<8x128xf32>
    %95 = tpu.matmul %94, %28, %cst_42 {dimension_numbers = #tpu.dot_dimension_numbers<[1], [0], [0], [1], [0, 0, 1, 1], [], []>} : vector<8x16xbf16>, vector<16x128xbf16>, vector<8x128xf32> -> vector<8x128xf32>
    %96 = arith.truncf %95 : vector<8x128xf32> to vector<8x128xbf16>
    %cst_43 = arith.constant dense<0.000000e+00> : vector<8x128xf32>
    %97 = tpu.matmul %31, %96, %cst_43 {dimension_numbers = #tpu.dot_dimension_numbers<[1], [0], [0], [1], [0, 0, 1, 1], [], []>} : vector<8x8xbf16>, vector<8x128xbf16>, vector<8x128xf32> -> vector<8x128xf32>
    %98 = vector.broadcast %32 : vector<8x1xf32> to vector<8x128xf32>
    %99 = arith.addf %97, %98 : vector<8x128xf32>
    %c1_44 = arith.constant 1 : index
    %c0_45 = arith.constant 0 : index
    %c0_46 = arith.constant 0 : index
    %100 = vector.load %arg8[%c1_44, %c0_45, %c0_46] : memref<2x8x128xf32, #tpu.memory_space<vmem>>, vector<1x8x128xf32>
    %101 = vector.shape_cast %100 : vector<1x8x128xf32> to vector<8x128xf32>
    %102 = vector.shape_cast %99 : vector<8x128xf32> to vector<1x8x128xf32>
    tpu.vector_store %arg8[%c1_44, %c0_45, %c0_46], %102 {strides = array<i32>} : memref<2x8x128xf32, #tpu.memory_space<vmem>>, vector<1x8x128xf32>,
    return
  }
  func.func @transform_0(%arg0: i32) -> (i32, i32, i32) {
    %c0_i32 = arith.constant 0 : i32
    %c0_i32_0 = arith.constant 0 : i32
    %c0_i32_1 = arith.constant 0 : i32
    return %arg0, %c0_i32, %c0_i32_0 : i32, i32, i32
  }
  func.func @transform_1(%arg0: i32) -> (i32, i32, i32) {
    %c0_i32 = arith.constant 0 : i32
    %c0_i32_0 = arith.constant 0 : i32
    %c0_i32_1 = arith.constant 0 : i32
    return %arg0, %c0_i32, %c0_i32_0 : i32, i32, i32
  }
  func.func @transform_2(%arg0: i32) -> (i32, i32, i32) {
    %c0_i32 = arith.constant 0 : i32
    %c0_i32_0 = arith.constant 0 : i32
    %c0_i32_1 = arith.constant 0 : i32
    return %arg0, %c0_i32, %c0_i32_0 : i32, i32, i32
  }
  func.func @transform_3(%arg0: i32) -> (i32, i32) {
    %c0_i32 = arith.constant 0 : i32
    %c0_i32_0 = arith.constant 0 : i32
    %c0_i32_1 = arith.constant 0 : i32
    return %c0_i32, %c0_i32_0 : i32, i32
  }
  func.func @transform_4(%arg0: i32) -> (i32, i32) {
    %c0_i32 = arith.constant 0 : i32
    %c0_i32_0 = arith.constant 0 : i32
    %c0_i32_1 = arith.constant 0 : i32
    return %c0_i32, %c0_i32_0 : i32, i32
  }
  func.func @transform_5(%arg0: i32) -> (i32, i32) {
    %c0_i32 = arith.constant 0 : i32
    %c0_i32_0 = arith.constant 0 : i32
    %c0_i32_1 = arith.constant 0 : i32
    return %c0_i32, %c0_i32_0 : i32, i32
  }
  func.func @transform_6(%arg0: i32) -> (i32, i32) {
    %c0_i32 = arith.constant 0 : i32
    %c0_i32_0 = arith.constant 0 : i32
    %c0_i32_1 = arith.constant 0 : i32
    return %c0_i32, %c0_i32_0 : i32, i32
  }
  func.func @transform_7(%arg0: i32) -> (i32, i32, i32) {
    %c0_i32 = arith.constant 0 : i32
    %c0_i32_0 = arith.constant 0 : i32
    %c0_i32_1 = arith.constant 0 : i32
    return %arg0, %c0_i32, %c0_i32_0 : i32, i32, i32
  }
}

</mosaic_0001>

<llo_original>
// kernel: tile.8
$region0: #{tile.8}
  #allocation0 [shape = 's32[1]{0}', space=sflag, size = 0x4, scoped, tag = 'scoped memory for tile.8']
  %s0 = inlined_call_operand.vmem [shape: s32[8], index: 0, kind: input, shape index: {}]
  %s1 = inlined_call_operand.vmem [shape: s32[2,8], index: 1, kind: output, shape index: {}]
  // Predicated region
  $region2: #{tile.8} parent=0 // pred_check
    _
  $region3: #{tile.8} parent=0 // pred_check_branch
    %3 = sbr.rel (0) target = $region5
  $region4: #{tile.8} parent=0 // pred_region
    _
  $region5: #{tile.8} parent=0 // pred_fallthru
    _
  %v4 = vld [vmem:[%s0] ss:$0 sm:$0xff]
  %5 = vst [vmem:[%s1] sm:$0x3] %v4

// kernel: eq.13
$region0: #{eq.13}
  %s0 = inlined_call_operand.vmem [shape: s32[2,8], index: 0, kind: input, shape index: {}]
  %s1 = inlined_call_operand.vmem [shape: s32[16], index: 1, kind: output, shape index: {}]
  $region1: #{eq.13} parent=0
    #allocation0 [shape = 'u8[4096]{0}', space=vmem, size = 0x1000, scoped, tag = 'scoped mem for output reshape']
    #allocation1 [shape = 'u8[4096]{0}', space=vmem, size = 0x1000, scoped, tag = 'scoped mem for input reshape']
    %s3 = sshllo.u32 0, 2
    %v4 = vld [vmem:[%s0] sm:%s3]
    %5 = vst [vmem:[#allocation1] sm:%s3] %v4
    %v6 = vld [vmem:[#allocation1] sm:$0x1]
    %vm7 = vcmask 64512
    %8 = vst.msk [vmem:[#allocation0] sm:$0x1] %vm7, %v6
    %s9 = scalar_lea.vmem [#allocation1], 1
    %v10 = vld [vmem:[%s9] sm:$0x1]
    %11 = vrot.lane.b32.xlu0 %v10, 8
    %v12 = vpop.permute.xlu0 %11
    %vm13 = vcmask 130112
    %14 = vst.msk [vmem:[#allocation0] sm:$0x1] %vm13, %v12
    %s16 = sshllo.u32 0, 1
    %v18 = vld [vmem:[#allocation0] sm:%s16]
    %s19 = sshllo.u32 0, 1
    %20 = vst [vmem:[%s1] sm:%s19] %v18

// kernel: squeeze.10
$region0: #{squeeze.10}
  %s0 = inlined_call_operand.vmem [shape: f32[8,3,3], index: 0, kind: input, shape index: {}]
  %s1 = inlined_call_operand.vmem [shape: f32[8,9], index: 1, kind: output, shape index: {}]
  $region1: #{squeeze.10} parent=0
    #allocation0 [shape = 'u8[12288]{0}', space=vmem, size = 0x3000, scoped, tag = 'scoped mem for input reshape']
    %s3 = sshllo.u32 0, 4
    %s4 = smul.addr 4, 2
    %s5 = scalar_lea.vmem %s0, %s4
    %v6 = vld [vmem:[%s5] sm:%s3]
    %s7 = scalar_lea.vmem [#allocation0], 16
    %8 = vst [vmem:[%s7] sm:%s3] %v6
    %s9 = scalar_lea.vmem %s0, 4
    %v10 = vld [vmem:[%s9] sm:%s3]
    %s11 = scalar_lea.vmem [#allocation0], 8
    %12 = vst [vmem:[%s11] sm:%s3] %v10
    %v13 = vld [vmem:[%s0] sm:%s3]
    %14 = vst [vmem:[#allocation0] sm:%s3] %v13
    %v15 = vld [vmem:[#allocation0] sm:$0x7]
    %vm16 = vcmask 64512
    %17 = vst.msk [vmem:[%s1] sm:$0x7] %vm16, %v15
    %s18 = scalar_lea.vmem [#allocation0], 8
    %v19 = vld [vmem:[%s18] sm:$0x7]
    %vm20 = vcmask 64512
    %s21 = scalar_lea.vmem %s1, 3
    %22 = vst.msk [vmem:[%s21] sm:$0x7] %vm20, %v19
    %s23 = scalar_lea.vmem [#allocation0], 16
    %v24 = vld [vmem:[%s23] sm:$0x7]
    %vm25 = vcmask 64512
    %s26 = scalar_lea.vmem %s1, 6
    %27 = vst.msk [vmem:[%s26] sm:$0x7] %vm25, %v24

// kernel: tr_attention_forward.4
$region0: #{tr_attention_forward.4}
  #allocation0 [shape = 'u32[]', space=smem, size = 0x4, offset = 0x4, fixed_abs, tag = 'smem constant byte address 0x4 - core index']
  #allocation1 [shape = 'u32[144,128]{1,0:T(1,128)}', space=vmem, size = 0x12000, scoped, tag = 'internal scratch']
  %s0 = inlined_call_operand.vmem [shape: bf16[4,8,128], index: 0, kind: input, shape index: {}]
  %s1 = inlined_call_operand.vmem [shape: bf16[8,8], index: 1, kind: input, shape index: {}]
  %s2 = inlined_call_operand.vmem [shape: f32[8,1], index: 2, kind: input, shape index: {}]
  %s3 = inlined_call_operand.vmem [shape: f32[8,9], index: 3, kind: input, shape index: {}]
  %s4 = inlined_call_operand.vmem [shape: f32[8,1], index: 4, kind: input, shape index: {}]
  %s5 = inlined_call_operand.vmem [shape: f32[9,128], index: 5, kind: input, shape index: {}]
  %s6 = inlined_call_operand.vmem [shape: bf16[4,8,128], index: 6, kind: output, shape index: {}]
  %s7 = sld [smem:[#allocation0]]
  $region34: #{tr_attention_forward.4} parent=0
    _
  %s9 = ssub.s32 1, %s7
  %s10 = scalar_select 0, %s9, %s7
  // Predicated region
  $region2: #{tr_attention_forward.4} parent=0 // pred_check
    _
  $region3: #{tr_attention_forward.4} parent=0 // pred_check_branch
    %12 = sbr.rel (0) target = $region5
  $region4: #{tr_attention_forward.4} parent=0 // pred_region
    _
  $region5: #{tr_attention_forward.4} parent=0 // pred_fallthru
    _
  // Predicated region
  $region6: #{tr_attention_forward.4} parent=0 // pred_check
    _
  $region7: #{tr_attention_forward.4} parent=0 // pred_check_branch
    %14 = sbr.rel (0) target = $region9
  $region8: #{tr_attention_forward.4} parent=0 // pred_region
    _
  $region9: #{tr_attention_forward.4} parent=0 // pred_fallthru
    _
  // Predicated region
  $region10: #{tr_attention_forward.4} parent=0 // pred_check
    _
  $region11: #{tr_attention_forward.4} parent=0 // pred_check_branch
    %16 = sbr.rel (0) target = $region13
  $region12: #{tr_attention_forward.4} parent=0 // pred_region
    _
  $region13: #{tr_attention_forward.4} parent=0 // pred_fallthru
    _
  // Predicated region
  $region14: #{tr_attention_forward.4} parent=0 // pred_check
    _
  $region15: #{tr_attention_forward.4} parent=0 // pred_check_branch
    %18 = sbr.rel (0) target = $region17
  $region16: #{tr_attention_forward.4} parent=0 // pred_region
    _
  $region17: #{tr_attention_forward.4} parent=0 // pred_fallthru
    _
  // Predicated region
  $region18: #{tr_attention_forward.4} parent=0 // pred_check
    _
  $region19: #{tr_attention_forward.4} parent=0 // pred_check_branch
    %20 = sbr.rel (0) target = $region21
  $region20: #{tr_attention_forward.4} parent=0 // pred_region
    _
  $region21: #{tr_attention_forward.4} parent=0 // pred_fallthru
    _
  // Predicated region
  $region22: #{tr_attention_forward.4} parent=0 // pred_check
    _
  $region23: #{tr_attention_forward.4} parent=0 // pred_check_branch
    %22 = sbr.rel (0) target = $region25
  $region24: #{tr_attention_forward.4} parent=0 // pred_region
    _
  $region25: #{tr_attention_forward.4} parent=0 // pred_fallthru
    _
  %v24 = vld [vmem:[%s1] sm:$0xf]
  %v25 = vld [vmem:[%s2] sm:$0xff]
  %v26 = vld [vmem:[%s3] sm:$0xff]
  %v27 = vld [vmem:[%s4] sm:$0xff]
  %v28 = vld [vmem:[%s5] sm:$0xff]
  %v29 = vld [vmem:[%s5 + $0x8] sm:$0x1]
  %v30 = vld [vmem:[%s0] sm:$0xf]
  %32 = vset.pattern.permute.xlu0 0
  %33 = vperm.xlu0 %32, %v25
  %v34 = vpop.permute.xlu0 %33
  %vm36 = vcmask 64512
  %v38 = vsel %vm36, %v24, 0
  %vm40 = vcmask 1043456
  %v42 = vsel %vm40, %v30, 0
  %44 = vmatprep.subr.bf16.mxu0 0
  %45 = vmatpush1.bf16.msra.mxu0 %v42
  %46 = vmatprep.subr.bf16.mxu0 0
  %47 = vmatpush1.bf16.msra.mxu0 0
  %48 = vmatprep.subr.bf16.mxu0 0
  %49 = vmatpush1.bf16.msra.mxu0 0
  %50 = vmatprep.subr.bf16.mxu0 0
  %51 = vmatpush1.bf16.msra.mxu0 0
  %52 = vmatprep.subr.bf16.mxu0 0
  %53 = vmatpush1.bf16.msra.mxu0 0
  %54 = vmatprep.subr.bf16.mxu0 0
  %55 = vmatpush1.bf16.msra.mxu0 0
  %56 = vmatprep.subr.bf16.mxu0 0
  %57 = vmatpush1.bf16.msra.mxu0 0
  %58 = vmatprep.subr.bf16.mxu0 0
  %59 = vmatpush1.bf16.msra.mxu0 0
  %60 = vmatprep.subr.bf16.mxu0 0
  %61 = vmatpush1.bf16.msra.mxu0 0
  %62 = vmatprep.subr.bf16.mxu0 0
  %63 = vmatpush1.bf16.msra.mxu0 0
  %64 = vmatprep.subr.bf16.mxu0 0
  %65 = vmatpush1.bf16.msra.mxu0 0
  %66 = vmatprep.subr.bf16.mxu0 0
  %67 = vmatpush1.bf16.msra.mxu0 0
  %68 = vmatprep.subr.bf16.mxu0 0
  %69 = vmatpush1.bf16.msra.mxu0 0
  %70 = vmatprep.subr.bf16.mxu0 0
  %71 = vmatpush1.bf16.msra.mxu0 0
  %72 = vmatprep.subr.bf16.mxu0 0
  %73 = vmatpush1.bf16.msra.mxu0 0
  %74 = vmatprep.subr.bf16.mxu0 0
  %75 = vmatpush1.bf16.msra.mxu0 0
  %76 = vmatprep.mubr.bf16.mxu0 0
  %77 = vmatmul.mubr.bf16.gmra.mrb[0].mxu0 %v38
  %v78 = vpop.f32.mrb[0].mxu0
  %v79 = vadd.f32 %v34, %v78
  %v80 = vpop.f32.mrb[0].mxu0
  %v81 = vpop.f32.mrb[0].mxu0
  %v82 = vpop.f32.mrb[0].mxu0
  %83 = vdwg.mxu0
  %84 = vrot.lane.b32.xlu0 %v79, 17
  %v85 = vpop.permute.xlu0 %84
  %v86 = vlaneseq
  %v87 = vshrl.u32 %v86, 7
  %v88 = vsub.s32 0, %v87
  %v89 = vrot.slane %v28, %v88
  %v90 = vmul.f32 %v85, %v89
  %92 = vset.pattern.permute.xlu0 0
  %93 = vperm.xlu0 %92, %v26
  %v94 = vpop.permute.xlu0 %93
  %v96 = vmul.f32 %v90, %v94
  %v97 = vadd.f32 %v96, 0.0
  %98 = vrot.lane.b32.xlu0 %v79, 16
  %v99 = vpop.permute.xlu0 %98
  %v100 = vlaneseq
  %v101 = vshrl.u32 %v100, 7
  %v102 = vsub.s32 1, %v101
  %v103 = vrot.slane %v28, %v102
  %v104 = vmul.f32 %v99, %v103
  %105 = vset.pattern.permute.xlu0 1
  %106 = vperm.xlu0 %105, %v26
  %v107 = vpop.permute.xlu0 %106
  %v109 = vmul.f32 %v104, %v107
  %v110 = vadd.f32 %v97, %v109
  %111 = vrot.lane.b32.xlu0 %v79, 15
  %v112 = vpop.permute.xlu0 %111
  %v113 = vlaneseq
  %v114 = vshrl.u32 %v113, 7
  %v115 = vsub.s32 2, %v114
  %v116 = vrot.slane %v28, %v115
  %v117 = vmul.f32 %v112, %v116
  %118 = vset.pattern.permute.xlu0 2
  %119 = vperm.xlu0 %118, %v26
  %v120 = vpop.permute.xlu0 %119
  %v122 = vmul.f32 %v117, %v120
  %v123 = vadd.f32 %v110, %v122
  %124 = vrot.lane.b32.xlu0 %v79, 1
  %v125 = vpop.permute.xlu0 %124
  %v126 = vlaneseq
  %v127 = vshrl.u32 %v126, 7
  %v128 = vsub.s32 3, %v127
  %v129 = vrot.slane %v28, %v128
  %v130 = vmul.f32 %v125, %v129
  %131 = vset.pattern.permute.xlu0 3
  %132 = vperm.xlu0 %131, %v26
  %v133 = vpop.permute.xlu0 %132
  %v135 = vmul.f32 %v130, %v133
  %v136 = vadd.f32 %v123, %v135
  %v137 = vlaneseq
  %v138 = vshrl.u32 %v137, 7
  %v139 = vsub.s32 4, %v138
  %v140 = vrot.slane %v28, %v139
  %v141 = vmul.f32 %v79, %v140
  %142 = vset.pattern.permute.xlu0 4
  %143 = vperm.xlu0 %142, %v26
  %v144 = vpop.permute.xlu0 %143
  %v146 = vmul.f32 %v141, %v144
  %v147 = vadd.f32 %v136, %v146
  %148 = vrot.lane.b32.xlu0 %v79, 127
  %v149 = vpop.permute.xlu0 %148
  %v150 = vlaneseq
  %v151 = vshrl.u32 %v150, 7
  %v152 = vsub.s32 5, %v151
  %v153 = vrot.slane %v28, %v152
  %v154 = vmul.f32 %v149, %v153
  %155 = vset.pattern.permute.xlu0 5
  %156 = vperm.xlu0 %155, %v26
  %v157 = vpop.permute.xlu0 %156
  %v159 = vmul.f32 %v154, %v157
  %v160 = vadd.f32 %v147, %v159
  %161 = vrot.lane.b32.xlu0 %v79, 113
  %v162 = vpop.permute.xlu0 %161
  %v163 = vlaneseq
  %v164 = vshrl.u32 %v163, 7
  %v165 = vsub.s32 6, %v164
  %v166 = vrot.slane %v28, %v165
  %v167 = vmul.f32 %v162, %v166
  %168 = vset.pattern.permute.xlu0 6
  %169 = vperm.xlu0 %168, %v26
  %v170 = vpop.permute.xlu0 %169
  %v172 = vmul.f32 %v167, %v170
  %v173 = vadd.f32 %v160, %v172
  %174 = vrot.lane.b32.xlu0 %v79, 112
  %v175 = vpop.permute.xlu0 %174
  %v176 = vlaneseq
  %v177 = vshrl.u32 %v176, 7
  %v178 = vsub.s32 7, %v177
  %v179 = vrot.slane %v28, %v178
  %v180 = vmul.f32 %v175, %v179
  %181 = vset.pattern.permute.xlu0 7
  %182 = vperm.xlu0 %181, %v26
  %v183 = vpop.permute.xlu0 %182
  %v185 = vmul.f32 %v180, %v183
  %v186 = vadd.f32 %v173, %v185
  %187 = vrot.lane.b32.xlu0 %v79, 111
  %v188 = vpop.permute.xlu0 %187
  %v189 = vlaneseq
  %v190 = vshrl.u32 %v189, 7
  %v191 = vsub.s32 0, %v190
  %v192 = vrot.slane %v29, %v191
  %v193 = vmul.f32 %v188, %v192
  %194 = vset.pattern.permute.xlu0 8
  %195 = vperm.xlu0 %194, %v26
  %v196 = vpop.permute.xlu0 %195
  %v198 = vmul.f32 %v193, %v196
  %v199 = vadd.f32 %v186, %v198
  %201 = vset.pattern.permute.xlu0 0
  %202 = vperm.xlu0 %201, %v27
  %v203 = vpop.permute.xlu0 %202
  %v205 = vadd.f32 %v199, %v203
  %v206 = vpack.c.bf16 %v205, %v205
  %207 = vst [vmem:[%s6] sm:$0xf] %v206
  %s208 = scalar_lea.vmem %s0, 4
  %v209 = vld [vmem:[%s208] sm:$0xf]
  %v211 = vsel %vm40, %v209, 0
  %213 = vmatprep.subr.bf16.mxu0 0
  %214 = vmatpush1.bf16.msra.mxu0 %v211
  %215 = vmatprep.subr.bf16.mxu0 0
  %216 = vmatpush1.bf16.msra.mxu0 0
  %217 = vmatprep.subr.bf16.mxu0 0
  %218 = vmatpush1.bf16.msra.mxu0 0
  %219 = vmatprep.subr.bf16.mxu0 0
  %220 = vmatpush1.bf16.msra.mxu0 0
  %221 = vmatprep.subr.bf16.mxu0 0
  %222 = vmatpush1.bf16.msra.mxu0 0
  %223 = vmatprep.subr.bf16.mxu0 0
  %224 = vmatpush1.bf16.msra.mxu0 0
  %225 = vmatprep.subr.bf16.mxu0 0
  %226 = vmatpush1.bf16.msra.mxu0 0
  %227 = vmatprep.subr.bf16.mxu0 0
  %228 = vmatpush1.bf16.msra.mxu0 0
  %229 = vmatprep.subr.bf16.mxu0 0
  %230 = vmatpush1.bf16.msra.mxu0 0
  %231 = vmatprep.subr.bf16.mxu0 0
  %232 = vmatpush1.bf16.msra.mxu0 0
  %233 = vmatprep.subr.bf16.mxu0 0
  %234 = vmatpush1.bf16.msra.mxu0 0
  %235 = vmatprep.subr.bf16.mxu0 0
  %236 = vmatpush1.bf16.msra.mxu0 0
  %237 = vmatprep.subr.bf16.mxu0 0
  %238 = vmatpush1.bf16.msra.mxu0 0
  %239 = vmatprep.subr.bf16.mxu0 0
  %240 = vmatpush1.bf16.msra.mxu0 0
  %241 = vmatprep.subr.bf16.mxu0 0
  %242 = vmatpush1.bf16.msra.mxu0 0
  %243 = vmatprep.subr.bf16.mxu0 0
  %244 = vmatpush1.bf16.msra.mxu0 0
  %245 = vmatprep.mubr.bf16.mxu0 0
  %246 = vmatmul.mubr.bf16.gmra.mrb[0].mxu0 %v38
  %v247 = vpop.f32.mrb[0].mxu0
  %v248 = vadd.f32 %v34, %v247
  %v249 = vpop.f32.mrb[0].mxu0
  %v250 = vpop.f32.mrb[0].mxu0
  %v251 = vpop.f32.mrb[0].mxu0
  %252 = vdwg.mxu0
  %253 = vrot.lane.b32.xlu0 %v248, 17
  %v254 = vpop.permute.xlu0 %253
  %v255 = vmul.f32 %v254, %v89
  %v256 = vmul.f32 %v255, %v94
  %v257 = vadd.f32 %v256, 0.0
  %258 = vrot.lane.b32.xlu0 %v248, 16
  %v259 = vpop.permute.xlu0 %258
  %v260 = vmul.f32 %v259, %v103
  %v261 = vmul.f32 %v260, %v107
  %v262 = vadd.f32 %v257, %v261
  %263 = vrot.lane.b32.xlu0 %v248, 15
  %v264 = vpop.permute.xlu0 %263
  %v265 = vmul.f32 %v264, %v116
  %v266 = vmul.f32 %v265, %v120
  %v267 = vadd.f32 %v262, %v266
  %268 = vrot.lane.b32.xlu0 %v248, 1
  %v269 = vpop.permute.xlu0 %268
  %v270 = vmul.f32 %v269, %v129
  %v271 = vmul.f32 %v270, %v133
  %v272 = vadd.f32 %v267, %v271
  %v273 = vmul.f32 %v248, %v140
  %v274 = vmul.f32 %v273, %v144
  %v275 = vadd.f32 %v272, %v274
  %276 = vrot.lane.b32.xlu0 %v248, 127
  %v277 = vpop.permute.xlu0 %276
  %v278 = vmul.f32 %v277, %v153
  %v279 = vmul.f32 %v278, %v157
  %v280 = vadd.f32 %v275, %v279
  %281 = vrot.lane.b32.xlu0 %v248, 113
  %v282 = vpop.permute.xlu0 %281
  %v283 = vmul.f32 %v282, %v166
  %v284 = vmul.f32 %v283, %v170
  %v285 = vadd.f32 %v280, %v284
  %286 = vrot.lane.b32.xlu0 %v248, 112
  %v287 = vpop.permute.xlu0 %286
  %v288 = vmul.f32 %v287, %v179
  %v289 = vmul.f32 %v288, %v183
  %v290 = vadd.f32 %v285, %v289
  %291 = vrot.lane.b32.xlu0 %v248, 111
  %v292 = vpop.permute.xlu0 %291
  %v293 = vmul.f32 %v292, %v192
  %v294 = vmul.f32 %v293, %v196
  %v295 = vadd.f32 %v290, %v294
  %v296 = vadd.f32 %v295, %v203
  %v297 = vpack.c.bf16 %v296, %v296
  %s298 = scalar_lea.vmem %s6, 4
  %299 = vst [vmem:[%s298] sm:$0xf] %v297
  %s300 = scalar_lea.vmem %s0, 8
  %v301 = vld [vmem:[%s300] sm:$0xf]
  %v303 = vsel %vm40, %v301, 0
  %305 = vmatprep.subr.bf16.mxu0 0
  %306 = vmatpush1.bf16.msra.mxu0 %v303
  %307 = vmatprep.subr.bf16.mxu0 0
  %308 = vmatpush1.bf16.msra.mxu0 0
  %309 = vmatprep.subr.bf16.mxu0 0
  %310 = vmatpush1.bf16.msra.mxu0 0
  %311 = vmatprep.subr.bf16.mxu0 0
  %312 = vmatpush1.bf16.msra.mxu0 0
  %313 = vmatprep.subr.bf16.mxu0 0
  %314 = vmatpush1.bf16.msra.mxu0 0
  %315 = vmatprep.subr.bf16.mxu0 0
  %316 = vmatpush1.bf16.msra.mxu0 0
  %317 = vmatprep.subr.bf16.mxu0 0
  %318 = vmatpush1.bf16.msra.mxu0 0
  %319 = vmatprep.subr.bf16.mxu0 0
  %320 = vmatpush1.bf16.msra.mxu0 0
  %321 = vmatprep.subr.bf16.mxu0 0
  %322 = vmatpush1.bf16.msra.mxu0 0
  %323 = vmatprep.subr.bf16.mxu0 0
  %324 = vmatpush1.bf16.msra.mxu0 0
  %325 = vmatprep.subr.bf16.mxu0 0
  %326 = vmatpush1.bf16.msra.mxu0 0
  %327 = vmatprep.subr.bf16.mxu0 0
  %328 = vmatpush1.bf16.msra.mxu0 0
  %329 = vmatprep.subr.bf16.mxu0 0
  %330 = vmatpush1.bf16.msra.mxu0 0
  %331 = vmatprep.subr.bf16.mxu0 0
  %332 = vmatpush1.bf16.msra.mxu0 0
  %333 = vmatprep.subr.bf16.mxu0 0
  %334 = vmatpush1.bf16.msra.mxu0 0
  %335 = vmatprep.subr.bf16.mxu0 0
  %336 = vmatpush1.bf16.msra.mxu0 0
  %337 = vmatprep.mubr.bf16.mxu0 0
  %338 = vmatmul.mubr.bf16.gmra.mrb[0].mxu0 %v38
  %v339 = vpop.f32.mrb[0].mxu0
  %v340 = vadd.f32 %v34, %v339
  %v341 = vpop.f32.mrb[0].mxu0
  %v342 = vpop.f32.mrb[0].mxu0
  %v343 = vpop.f32.mrb[0].mxu0
  %344 = vdwg.mxu0
  %345 = vrot.lane.b32.xlu0 %v340, 17
  %v346 = vpop.permute.xlu0 %345
  %v347 = vmul.f32 %v346, %v89
  %v348 = vmul.f32 %v347, %v94
  %v349 = vadd.f32 %v348, 0.0
  %350 = vrot.lane.b32.xlu0 %v340, 16
  %v351 = vpop.permute.xlu0 %350
  %v352 = vmul.f32 %v351, %v103
  %v353 = vmul.f32 %v352, %v107
  %v354 = vadd.f32 %v349, %v353
  %355 = vrot.lane.b32.xlu0 %v340, 15
  %v356 = vpop.permute.xlu0 %355
  %v357 = vmul.f32 %v356, %v116
  %v358 = vmul.f32 %v357, %v120
  %v359 = vadd.f32 %v354, %v358
  %360 = vrot.lane.b32.xlu0 %v340, 1
  %v361 = vpop.permute.xlu0 %360
  %v362 = vmul.f32 %v361, %v129
  %v363 = vmul.f32 %v362, %v133
  %v364 = vadd.f32 %v359, %v363
  %v365 = vmul.f32 %v340, %v140
  %v366 = vmul.f32 %v365, %v144
  %v367 = vadd.f32 %v364, %v366
  %368 = vrot.lane.b32.xlu0 %v340, 127
  %v369 = vpop.permute.xlu0 %368
  %v370 = vmul.f32 %v369, %v153
  %v371 = vmul.f32 %v370, %v157
  %v372 = vadd.f32 %v367, %v371
  %373 = vrot.lane.b32.xlu0 %v340, 113
  %v374 = vpop.permute.xlu0 %373
  %v375 = vmul.f32 %v374, %v166
  %v376 = vmul.f32 %v375, %v170
  %v377 = vadd.f32 %v372, %v376
  %378 = vrot.lane.b32.xlu0 %v340, 112
  %v379 = vpop.permute.xlu0 %378
  %v380 = vmul.f32 %v379, %v179
  %v381 = vmul.f32 %v380, %v183
  %v382 = vadd.f32 %v377, %v381
  %383 = vrot.lane.b32.xlu0 %v340, 111
  %v384 = vpop.permute.xlu0 %383
  %v385 = vmul.f32 %v384, %v192
  %v386 = vmul.f32 %v385, %v196
  %v387 = vadd.f32 %v382, %v386
  %v388 = vadd.f32 %v387, %v203
  %v389 = vpack.c.bf16 %v388, %v388
  %s390 = scalar_lea.vmem %s6, 8
  %391 = vst [vmem:[%s390] sm:$0xf] %v389
  %s392 = scalar_lea.vmem %s0, 12
  %v393 = vld [vmem:[%s392] sm:$0xf]
  %v395 = vsel %vm40, %v393, 0
  %397 = vmatprep.subr.bf16.mxu0 0
  %398 = vmatpush1.bf16.msra.mxu0 %v395
  %399 = vmatprep.subr.bf16.mxu0 0
  %400 = vmatpush1.bf16.msra.mxu0 0
  %401 = vmatprep.subr.bf16.mxu0 0
  %402 = vmatpush1.bf16.msra.mxu0 0
  %403 = vmatprep.subr.bf16.mxu0 0
  %404 = vmatpush1.bf16.msra.mxu0 0
  %405 = vmatprep.subr.bf16.mxu0 0
  %406 = vmatpush1.bf16.msra.mxu0 0
  %407 = vmatprep.subr.bf16.mxu0 0
  %408 = vmatpush1.bf16.msra.mxu0 0
  %409 = vmatprep.subr.bf16.mxu0 0
  %410 = vmatpush1.bf16.msra.mxu0 0
  %411 = vmatprep.subr.bf16.mxu0 0
  %412 = vmatpush1.bf16.msra.mxu0 0
  %413 = vmatprep.subr.bf16.mxu0 0
  %414 = vmatpush1.bf16.msra.mxu0 0
  %415 = vmatprep.subr.bf16.mxu0 0
  %416 = vmatpush1.bf16.msra.mxu0 0
  %417 = vmatprep.subr.bf16.mxu0 0
  %418 = vmatpush1.bf16.msra.mxu0 0
  %419 = vmatprep.subr.bf16.mxu0 0
  %420 = vmatpush1.bf16.msra.mxu0 0
  %421 = vmatprep.subr.bf16.mxu0 0
  %422 = vmatpush1.bf16.msra.mxu0 0
  %423 = vmatprep.subr.bf16.mxu0 0
  %424 = vmatpush1.bf16.msra.mxu0 0
  %425 = vmatprep.subr.bf16.mxu0 0
  %426 = vmatpush1.bf16.msra.mxu0 0
  %427 = vmatprep.subr.bf16.mxu0 0
  %428 = vmatpush1.bf16.msra.mxu0 0
  %429 = vmatprep.mubr.bf16.mxu0 0
  %430 = vmatmul.mubr.bf16.gmra.mrb[0].mxu0 %v38
  %v431 = vpop.f32.mrb[0].mxu0
  %v432 = vadd.f32 %v34, %v431
  %v433 = vpop.f32.mrb[0].mxu0
  %v434 = vpop.f32.mrb[0].mxu0
  %v435 = vpop.f32.mrb[0].mxu0
  %436 = vdwg.mxu0
  %437 = vrot.lane.b32.xlu0 %v432, 17
  %v438 = vpop.permute.xlu0 %437
  %v439 = vmul.f32 %v438, %v89
  %v440 = vmul.f32 %v439, %v94
  %v441 = vadd.f32 %v440, 0.0
  %442 = vrot.lane.b32.xlu0 %v432, 16
  %v443 = vpop.permute.xlu0 %442
  %v444 = vmul.f32 %v443, %v103
  %v445 = vmul.f32 %v444, %v107
  %v446 = vadd.f32 %v441, %v445
  %447 = vrot.lane.b32.xlu0 %v432, 15
  %v448 = vpop.permute.xlu0 %447
  %v449 = vmul.f32 %v448, %v116
  %v450 = vmul.f32 %v449, %v120
  %v451 = vadd.f32 %v446, %v450
  %452 = vrot.lane.b32.xlu0 %v432, 1
  %v453 = vpop.permute.xlu0 %452
  %v454 = vmul.f32 %v453, %v129
  %v455 = vmul.f32 %v454, %v133
  %v456 = vadd.f32 %v451, %v455
  %v457 = vmul.f32 %v432, %v140
  %v458 = vmul.f32 %v457, %v144
  %v459 = vadd.f32 %v456, %v458
  %460 = vrot.lane.b32.xlu0 %v432, 127
  %v461 = vpop.permute.xlu0 %460
  %v462 = vmul.f32 %v461, %v153
  %v463 = vmul.f32 %v462, %v157
  %v464 = vadd.f32 %v459, %v463
  %465 = vrot.lane.b32.xlu0 %v432, 113
  %v466 = vpop.permute.xlu0 %465
  %v467 = vmul.f32 %v466, %v166
  %v468 = vmul.f32 %v467, %v170
  %v469 = vadd.f32 %v464, %v468
  %470 = vrot.lane.b32.xlu0 %v432, 112
  %v471 = vpop.permute.xlu0 %470
  %v472 = vmul.f32 %v471, %v179
  %v473 = vmul.f32 %v472, %v183
  %v474 = vadd.f32 %v469, %v473
  %475 = vrot.lane.b32.xlu0 %v432, 111
  %v476 = vpop.permute.xlu0 %475
  %v477 = vmul.f32 %v476, %v192
  %v478 = vmul.f32 %v477, %v196
  %v479 = vadd.f32 %v474, %v478
  %v480 = vadd.f32 %v479, %v203
  %v481 = vpack.c.bf16 %v480, %v480
  %s482 = scalar_lea.vmem %s6, 12
  %483 = vst [vmem:[%s482] sm:$0xf] %v481
  // Predicated region
  $region26: #{tr_attention_forward.4} parent=0 // pred_check
    _
  $region27: #{tr_attention_forward.4} parent=0 // pred_check_branch
    %485 = sbr.rel (0) target = $region29
  $region28: #{tr_attention_forward.4} parent=0 // pred_region
    _
  $region29: #{tr_attention_forward.4} parent=0 // pred_fallthru
    _
  // Predicated region
  $region30: #{tr_attention_forward.4} parent=0 // pred_check
    _
  $region31: #{tr_attention_forward.4} parent=0 // pred_check_branch
    %487 = sbr.rel (0) target = $region33
  $region32: #{tr_attention_forward.4} parent=0 // pred_region
    _
  $region33: #{tr_attention_forward.4} parent=0 // pred_fallthru
    _

// kernel: tr_attention_forward.7
$region0: #{tr_attention_forward.7}
  #allocation0 [shape = 'u32[]', space=smem, size = 0x4, offset = 0x4, fixed_abs, tag = 'smem constant byte address 0x4 - core index']
  #allocation1 [shape = 'u32[144,128]{1,0:T(1,128)}', space=vmem, size = 0x12000, scoped, tag = 'internal scratch']
  %s0 = inlined_call_operand.vmem [shape: bf16[4,8,128], index: 0, kind: input, shape index: {}]
  %s1 = inlined_call_operand.vmem [shape: bf16[4,8,128], index: 1, kind: input, shape index: {}]
  %s2 = inlined_call_operand.vmem [shape: bf16[4,8,128], index: 2, kind: input, shape index: {}]
  %s3 = inlined_call_operand.vmem [shape: f32[8,1], index: 3, kind: input, shape index: {}]
  %s4 = inlined_call_operand.vmem [shape: f32[8,16], index: 4, kind: input, shape index: {}]
  %s5 = inlined_call_operand.vmem [shape: bf16[8,8], index: 5, kind: input, shape index: {}]
  %s6 = inlined_call_operand.vmem [shape: f32[8,1], index: 6, kind: input, shape index: {}]
  %s7 = inlined_call_operand.vmem [shape: f32[4,8,128], index: 7, kind: output, shape index: {}]
  %s8 = sld [smem:[#allocation0]]
  $region61: #{tr_attention_forward.7} parent=0
    _
  %s10 = ssub.s32 1, %s8
  %s11 = scalar_select 0, %s10, %s8
  loop: start=0, step=1, limit=4
  $region2: #{tr_attention_forward.7} parent=0 // loop_pre_header
    _
  $region3: #{tr_attention_forward.7} parent=0 // loop_header
    %s13 = sphi 0, %s17
    %p14 = scmp.ge.s32.totalorder %s13, 4
    %s23 = sphi 0, %s25
    %s26 = sphi 0, %s23
    %s27 = sphi 0, %s26
    %s43 = sphi 0, %s27
    %s49 = sphi 0, %s51
    %s52 = sphi 0, %s49
    %s53 = sphi 0, %s52
    %s69 = sphi 0, %s53
    %s75 = sphi 0, %s77
    %s78 = sphi 0, %s75
    %s79 = sphi 0, %s78
    %s95 = sphi 0, %s79
    %s99 = sphi 0, %s99
    %s101 = sphi 0, %s99
    %s102 = sphi 0, %s101
    %s116 = sphi 0, %s102
    %s120 = sphi 0, %s120
    %s122 = sphi 0, %s120
    %s123 = sphi 0, %s122
    %s137 = sphi 0, %s123
    %s141 = sphi 0, %s141
    %s143 = sphi 0, %s141
    %s144 = sphi 0, %s143
    %s158 = sphi 0, %s144
    %s162 = sphi 0, %s162
    %s164 = sphi 0, %s162
    %s165 = sphi 0, %s164
    %s179 = sphi 0, %s165
    %s185 = sphi 0, %s187
    %s188 = sphi 0, %s185
    %s189 = sphi 0, %s188
    %s205 = sphi 0, %s189
  $region4: #{tr_attention_forward.7} parent=0 // loop_header_branch
    %16 = sbr.rel (%p14) target = $region8
  $region5: #{tr_attention_forward.7} parent=0 // loop_body
    %s18 = ssub.s32 %s13, 1
    %s19 = ssub.s32 %s13, 2
    %s20 = sadd.s32 %s13, 1
    %s21 = ssub.s32 %s13, %s20
    %p22 = scmp.eq.s32.totalorder %s21, 0
    %s24 = sadd.s32 %s23, 1
    %s25 = scalar_select %p22, %s23, %s24
    %p28 = pneg %p22
    %p29 = scmp.eq.s32.totalorder %s13, 1
    %p30 = por %p28, %p29
    %p31 = scmp.ne.s32.totalorder %s23, %s26
    %p32 = scmp.eq.s32.totalorder %s13, 0
    %p33 = por %p31, %p32
    %p34 = scmp.ne.s32.totalorder %s23, %s26
    %p35 = scmp.eq.s32.totalorder %s18, 1
    %p36 = por %p34, %p35
    %p37 = scmp.ne.s32.totalorder %s26, %s27
    %p38 = scmp.eq.s32.totalorder %s18, 0
    %p39 = por %p37, %p38
    %p40 = scmp.ne.s32.totalorder %s26, %s27
    %p41 = scmp.eq.s32.totalorder %s19, 1
    %p42 = por %p40, %p41
    %p44 = scmp.ne.s32.totalorder %s27, %s43
    %p45 = scmp.eq.s32.totalorder %s19, 0
    %p46 = por %p44, %p45
    %s47 = ssub.s32 %s13, %s20
    %p48 = scmp.eq.s32.totalorder %s47, 0
    %s50 = sadd.s32 %s49, 1
    %s51 = scalar_select %p48, %s49, %s50
    %p54 = pneg %p48
    %p55 = scmp.eq.s32.totalorder %s13, 1
    %p56 = por %p54, %p55
    %p57 = scmp.ne.s32.totalorder %s49, %s52
    %p58 = scmp.eq.s32.totalorder %s13, 0
    %p59 = por %p57, %p58
    %p60 = scmp.ne.s32.totalorder %s49, %s52
    %p61 = scmp.eq.s32.totalorder %s18, 1
    %p62 = por %p60, %p61
    %p63 = scmp.ne.s32.totalorder %s52, %s53
    %p64 = scmp.eq.s32.totalorder %s18, 0
    %p65 = por %p63, %p64
    %p66 = scmp.ne.s32.totalorder %s52, %s53
    %p67 = scmp.eq.s32.totalorder %s19, 1
    %p68 = por %p66, %p67
    %p70 = scmp.ne.s32.totalorder %s53, %s69
    %p71 = scmp.eq.s32.totalorder %s19, 0
    %p72 = por %p70, %p71
    %s73 = ssub.s32 %s13, %s20
    %p74 = scmp.eq.s32.totalorder %s73, 0
    %s76 = sadd.s32 %s75, 1
    %s77 = scalar_select %p74, %s75, %s76
    %p80 = pneg %p74
    %p81 = scmp.eq.s32.totalorder %s13, 1
    %p82 = por %p80, %p81
    %p83 = scmp.ne.s32.totalorder %s75, %s78
    %p84 = scmp.eq.s32.totalorder %s13, 0
    %p85 = por %p83, %p84
    %p86 = scmp.ne.s32.totalorder %s75, %s78
    %p87 = scmp.eq.s32.totalorder %s18, 1
    %p88 = por %p86, %p87
    %p89 = scmp.ne.s32.totalorder %s78, %s79
    %p90 = scmp.eq.s32.totalorder %s18, 0
    %p91 = por %p89, %p90
    %p92 = scmp.ne.s32.totalorder %s78, %s79
    %p93 = scmp.eq.s32.totalorder %s19, 1
    %p94 = por %p92, %p93
    %p96 = scmp.ne.s32.totalorder %s79, %s95
    %p97 = scmp.eq.s32.totalorder %s19, 0
    %p98 = por %p96, %p97
    %s100 = sadd.s32 %s99, 1
    %p103 = scmp.eq.s32.totalorder %s13, 1
    %p104 = scmp.ne.s32.totalorder %s99, %s101
    %p105 = scmp.eq.s32.totalorder %s13, 0
    %p106 = por %p104, %p105
    %p107 = scmp.ne.s32.totalorder %s99, %s101
    %p108 = scmp.eq.s32.totalorder %s18, 1
    %p109 = por %p107, %p108
    %p110 = scmp.ne.s32.totalorder %s101, %s102
    %p111 = scmp.eq.s32.totalorder %s18, 0
    %p112 = por %p110, %p111
    %p113 = scmp.ne.s32.totalorder %s101, %s102
    %p114 = scmp.eq.s32.totalorder %s19, 1
    %p115 = por %p113, %p114
    %p117 = scmp.ne.s32.totalorder %s102, %s116
    %p118 = scmp.eq.s32.totalorder %s19, 0
    %p119 = por %p117, %p118
    %s121 = sadd.s32 %s120, 1
    %p124 = scmp.eq.s32.totalorder %s13, 1
    %p125 = scmp.ne.s32.totalorder %s120, %s122
    %p126 = scmp.eq.s32.totalorder %s13, 0
    %p127 = por %p125, %p126
    %p128 = scmp.ne.s32.totalorder %s120, %s122
    %p129 = scmp.eq.s32.totalorder %s18, 1
    %p130 = por %p128, %p129
    %p131 = scmp.ne.s32.totalorder %s122, %s123
    %p132 = scmp.eq.s32.totalorder %s18, 0
    %p133 = por %p131, %p132
    %p134 = scmp.ne.s32.totalorder %s122, %s123
    %p135 = scmp.eq.s32.totalorder %s19, 1
    %p136 = por %p134, %p135
    %p138 = scmp.ne.s32.totalorder %s123, %s137
    %p139 = scmp.eq.s32.totalorder %s19, 0
    %p140 = por %p138, %p139
    %s142 = sadd.s32 %s141, 1
    %p145 = scmp.eq.s32.totalorder %s13, 1
    %p146 = scmp.ne.s32.totalorder %s141, %s143
    %p147 = scmp.eq.s32.totalorder %s13, 0
    %p148 = por %p146, %p147
    %p149 = scmp.ne.s32.totalorder %s141, %s143
    %p150 = scmp.eq.s32.totalorder %s18, 1
    %p151 = por %p149, %p150
    %p152 = scmp.ne.s32.totalorder %s143, %s144
    %p153 = scmp.eq.s32.totalorder %s18, 0
    %p154 = por %p152, %p153
    %p155 = scmp.ne.s32.totalorder %s143, %s144
    %p156 = scmp.eq.s32.totalorder %s19, 1
    %p157 = por %p155, %p156
    %p159 = scmp.ne.s32.totalorder %s144, %s158
    %p160 = scmp.eq.s32.totalorder %s19, 0
    %p161 = por %p159, %p160
    %s163 = sadd.s32 %s162, 1
    %p166 = scmp.eq.s32.totalorder %s13, 1
    %p167 = scmp.ne.s32.totalorder %s162, %s164
    %p168 = scmp.eq.s32.totalorder %s13, 0
    %p169 = por %p167, %p168
    %p170 = scmp.ne.s32.totalorder %s162, %s164
    %p171 = scmp.eq.s32.totalorder %s18, 1
    %p172 = por %p170, %p171
    %p173 = scmp.ne.s32.totalorder %s164, %s165
    %p174 = scmp.eq.s32.totalorder %s18, 0
    %p175 = por %p173, %p174
    %p176 = scmp.ne.s32.totalorder %s164, %s165
    %p177 = scmp.eq.s32.totalorder %s19, 1
    %p178 = por %p176, %p177
    %p180 = scmp.ne.s32.totalorder %s165, %s179
    %p181 = scmp.eq.s32.totalorder %s19, 0
    %p182 = por %p180, %p181
    %s183 = ssub.s32 %s13, %s20
    %p184 = scmp.eq.s32.totalorder %s183, 0
    %s186 = sadd.s32 %s185, 1
    %s187 = scalar_select %p184, %s185, %s186
    %p190 = pneg %p184
    %p191 = scmp.eq.s32.totalorder %s13, 1
    %p192 = por %p190, %p191
    %p193 = scmp.ne.s32.totalorder %s185, %s188
    %p194 = scmp.eq.s32.totalorder %s13, 0
    %p195 = por %p193, %p194
    %p196 = scmp.ne.s32.totalorder %s185, %s188
    %p197 = scmp.eq.s32.totalorder %s18, 1
    %p198 = por %p196, %p197
    %p199 = scmp.ne.s32.totalorder %s188, %s189
    %p200 = scmp.eq.s32.totalorder %s18, 0
    %p201 = por %p199, %p200
    %p202 = scmp.ne.s32.totalorder %s188, %s189
    %p203 = scmp.eq.s32.totalorder %s19, 1
    %p204 = por %p202, %p203
    %p206 = scmp.ne.s32.totalorder %s189, %s205
    %p207 = scmp.eq.s32.totalorder %s19, 0
    %p208 = por %p206, %p207
    %p209 = scmp.le.s32.totalorder 1, %s13
    %p210 = scmp.lt.s32.totalorder %s13, 3
    %p211 = pnand %p209, %p210
    %p212 = pneg %p211
    // Predicated region
    $region9: #{tr_attention_forward.7} parent=5 // pred_check
      _
    $region10: #{tr_attention_forward.7} parent=5 // pred_check_branch
      %214 = sbr.rel (%p211) target = $region12
    $region11: #{tr_attention_forward.7} parent=5 // pred_region
      %s215 = ssub.s32 %s13, 1
      // Predicated region
      $region13: #{tr_attention_forward.7} parent=11 // pred_check
        %p216 = pneg %p112
      $region14: #{tr_attention_forward.7} parent=11 // pred_check_branch
        %218 = sbr.rel (%p216) target = $region16
      $region15: #{tr_attention_forward.7} parent=11 // pred_region
        _
      $region16: #{tr_attention_forward.7} parent=11 // pred_fallthru
        _
      // Predicated region
      $region17: #{tr_attention_forward.7} parent=11 // pred_check
        %p219 = pneg %p133
      $region18: #{tr_attention_forward.7} parent=11 // pred_check_branch
        %221 = sbr.rel (%p219) target = $region20
      $region19: #{tr_attention_forward.7} parent=11 // pred_region
        _
      $region20: #{tr_attention_forward.7} parent=11 // pred_fallthru
        _
      // Predicated region
      $region21: #{tr_attention_forward.7} parent=11 // pred_check
        %p222 = pneg %p154
      $region22: #{tr_attention_forward.7} parent=11 // pred_check_branch
        %224 = sbr.rel (%p222) target = $region24
      $region23: #{tr_attention_forward.7} parent=11 // pred_region
        _
      $region24: #{tr_attention_forward.7} parent=11 // pred_fallthru
        _
      // Predicated region
      $region25: #{tr_attention_forward.7} parent=11 // pred_check
        %p225 = pneg %p175
      $region26: #{tr_attention_forward.7} parent=11 // pred_check_branch
        %227 = sbr.rel (%p225) target = $region28
      $region27: #{tr_attention_forward.7} parent=11 // pred_region
        _
      $region28: #{tr_attention_forward.7} parent=11 // pred_fallthru
        _
    $region12: #{tr_attention_forward.7} parent=5 // pred_fallthru
      _
    %p228 = scmp.lt.s32.totalorder %s13, 2
    // Predicated region
    $region29: #{tr_attention_forward.7} parent=5 // pred_check
      %p229 = pneg %p228
    $region30: #{tr_attention_forward.7} parent=5 // pred_check_branch
      %231 = sbr.rel (%p229) target = $region32
    $region31: #{tr_attention_forward.7} parent=5 // pred_region
      // Predicated region
      $region33: #{tr_attention_forward.7} parent=31 // pred_check
        %p232 = pneg %p33
      $region34: #{tr_attention_forward.7} parent=31 // pred_check_branch
        %234 = sbr.rel (%p232) target = $region36
      $region35: #{tr_attention_forward.7} parent=31 // pred_region
        %s235 = smul.u32 2, %s13
        %p236 = scmp.lt.s32.totalorder %s235, 3
        %s237 = scalar_select %p236, %s235, 3
        %s238 = smul.addr %s237, 4
        %s239 = scalar_lea.vmem %s0, %s238
        %s240 = smul.u32 2, %s13
      $region36: #{tr_attention_forward.7} parent=31 // pred_fallthru
        _
      // Predicated region
      $region37: #{tr_attention_forward.7} parent=31 // pred_check
        %p241 = pneg %p59
      $region38: #{tr_attention_forward.7} parent=31 // pred_check_branch
        %243 = sbr.rel (%p241) target = $region40
      $region39: #{tr_attention_forward.7} parent=31 // pred_region
        %s244 = smul.u32 2, %s13
        %p245 = scmp.lt.s32.totalorder %s244, 3
        %s246 = scalar_select %p245, %s244, 3
        %s247 = smul.addr %s246, 4
        %s248 = scalar_lea.vmem %s1, %s247
        %s249 = smul.u32 2, %s13
      $region40: #{tr_attention_forward.7} parent=31 // pred_fallthru
        _
      // Predicated region
      $region41: #{tr_attention_forward.7} parent=31 // pred_check
        %p250 = pneg %p85
      $region42: #{tr_attention_forward.7} parent=31 // pred_check_branch
        %252 = sbr.rel (%p250) target = $region44
      $region43: #{tr_attention_forward.7} parent=31 // pred_region
        %s253 = smul.u32 2, %s13
        %p254 = scmp.lt.s32.totalorder %s253, 3
        %s255 = scalar_select %p254, %s253, 3
        %s256 = smul.addr %s255, 4
        %s257 = scalar_lea.vmem %s2, %s256
        %s258 = smul.u32 2, %s13
      $region44: #{tr_attention_forward.7} parent=31 // pred_fallthru
        _
    $region32: #{tr_attention_forward.7} parent=5 // pred_fallthru
      _
    %p259 = scmp.le.s32.totalorder 1, %s13
    %p260 = scmp.lt.s32.totalorder %s13, 3
    %p261 = pnand %p259, %p260
    %p262 = pneg %p261
    // Predicated region
    $region45: #{tr_attention_forward.7} parent=5 // pred_check
      _
    $region46: #{tr_attention_forward.7} parent=5 // pred_check_branch
      %264 = sbr.rel (%p261) target = $region48
    $region47: #{tr_attention_forward.7} parent=5 // pred_region
      %s265 = ssub.s32 %s13, 1
      %s266 = smul.u32 2, %s18
      %p267 = scmp.lt.s32.totalorder %s266, 3
      %s268 = scalar_select %p267, %s266, 3
      %s269 = smul.addr %s268, 4
      %s270 = scalar_lea.vmem %s0, %s269
      %p271 = pneg %p39
      %p272 = pneg %p36
      %s273 = smul.u32 2, %s18
      %p274 = scmp.lt.s32.totalorder %s273, 3
      %s275 = scalar_select %p274, %s273, 3
      %s276 = smul.addr %s275, 4
      %s277 = scalar_lea.vmem %s1, %s276
      %p278 = pneg %p65
      %p279 = pneg %p62
      %s280 = smul.u32 2, %s18
      %p281 = scmp.lt.s32.totalorder %s280, 3
      %s282 = scalar_select %p281, %s280, 3
      %s283 = smul.addr %s282, 4
      %s284 = scalar_lea.vmem %s2, %s283
      %p285 = pneg %p91
      %p286 = pneg %p88
      %p287 = pneg %p112
      %p288 = pneg %p109
      %p289 = pneg %p133
      %p290 = pneg %p130
      %p291 = pneg %p154
      %p292 = pneg %p151
      %p293 = pneg %p175
      %p294 = pneg %p172
      %p295 = pneg %p201
      %p296 = pneg %p198
      %s297 = smul.u32 2, %s18
      %p298 = scmp.lt.s32.totalorder %s297, 3
      %s299 = scalar_select %p298, %s297, 3
      %s300 = smul.addr %s299, 8
      %s301 = scalar_lea.vmem %s7, %s300
      %s302 = smul.u32 2, %s18
      %p303 = scmp.lt.s32.totalorder %s302, 3
      %s304 = scalar_select %p303, %s302, 3
      %s305 = smul.addr %s304, 4
      %s306 = scalar_lea.vmem %s0, %s305
      %s307 = smul.u32 2, %s18
      %s308 = smul.u32 2, %s18
      %p309 = scmp.lt.s32.totalorder %s308, 3
      %s310 = scalar_select %p309, %s308, 3
      %s311 = smul.addr %s310, 4
      %s312 = scalar_lea.vmem %s1, %s311
      %s313 = smul.u32 2, %s18
      %s314 = smul.u32 2, %s18
      %p315 = scmp.lt.s32.totalorder %s314, 3
      %s316 = scalar_select %p315, %s314, 3
      %s317 = smul.addr %s316, 4
      %s318 = scalar_lea.vmem %s2, %s317
      %s319 = smul.u32 2, %s18
      %s320 = smul.u32 2, %s18
      %p321 = scmp.lt.s32.totalorder %s320, 3
      %s322 = scalar_select %p321, %s320, 3
      %s323 = smul.addr %s322, 8
      %s324 = scalar_lea.vmem %s7, %s323
      %s325 = smul.u32 2, %s18
      %v327 = vld [vmem:[%s312] sm:$0xf]
      %v328 = vunpack.c.l.bf16 %v327
      %v329 = vmul.f32 %v328, %v328
      %330 = vadd.xlane.f32.xlu0 %v329
      %v331 = vpop.xlane.xlu0 %330
      %v332 = vmax.f32 %v331, 1e-24
      %v333 = vrsqrt.pop %v332
      %v334 = vmul.f32 %v328, %v333
      %v335 = vld [vmem:[%s318] sm:$0xf]
      %s336 = scalar_lea.vmem %s312, 4
      %v337 = vld [vmem:[%s336] sm:$0xf]
      %v338 = vunpack.c.l.bf16 %v337
      %v339 = vmul.f32 %v338, %v338
      %340 = vadd.xlane.f32.xlu0 %v339
      %v341 = vpop.xlane.xlu0 %340
      %v342 = vmax.f32 %v341, 1e-24
      %v343 = vrsqrt.pop %v342
      %v344 = vmul.f32 %v338, %v343
      %s345 = scalar_lea.vmem %s318, 4
      %v346 = vld [vmem:[%s345] sm:$0xf]
      %v347 = vpack.c.bf16 %v344, %v334
      %v349 = vunpack.c.l.b16 %v346
      %v350 = vpack.c.b16 %v349, %v349
      %vm351 = vcmask 1043456
      %v354 = vsel %vm351, %v335, %v350
      %v356 = vld [vmem:[%s3] sm:$0xff]
      %v357 = vld [vmem:[%s4] sm:$0xff]
      %v358 = vld [vmem:[%s5] sm:$0xf]
      %v359 = vld [vmem:[%s6] sm:$0xff]
      %v360 = vld [vmem:[%s306] sm:$0xf]
      %v361 = vunpack.c.l.bf16 %v360
      %v362 = vmul.f32 %v361, %v361
      %363 = vadd.xlane.f32.xlu0 %v362
      %v364 = vpop.xlane.xlu0 %363
      %v365 = vmax.f32 %v364, 1e-24
      %v366 = vrsqrt.pop %v365
      %v367 = vmul.f32 %v361, %v366
      %v368 = vpack.c.bf16 %v367, %v367
      %369 = vmatprep.subr.bf16.mxu0 0
      %370 = vmatpush1.bf16.xpose.msra.mxu0 %v347
      %371 = vmatprep.subr.bf16.mxu0 0
      %372 = vmatpush1.bf16.xpose.msra.mxu0 0
      %373 = vmatprep.subr.bf16.mxu0 0
      %374 = vmatpush1.bf16.xpose.msra.mxu0 0
      %375 = vmatprep.subr.bf16.mxu0 0
      %376 = vmatpush1.bf16.xpose.msra.mxu0 0
      %377 = vmatprep.subr.bf16.mxu0 0
      %378 = vmatpush1.bf16.xpose.msra.mxu0 0
      %379 = vmatprep.subr.bf16.mxu0 0
      %380 = vmatpush1.bf16.xpose.msra.mxu0 0
      %381 = vmatprep.subr.bf16.mxu0 0
      %382 = vmatpush1.bf16.xpose.msra.mxu0 0
      %383 = vmatprep.subr.bf16.mxu0 0
      %384 = vmatpush1.bf16.xpose.msra.mxu0 0
      %385 = vmatprep.subr.bf16.mxu0 0
      %386 = vmatpush1.bf16.xpose.msra.mxu0 0
      %387 = vmatprep.subr.bf16.mxu0 0
      %388 = vmatpush1.bf16.xpose.msra.mxu0 0
      %389 = vmatprep.subr.bf16.mxu0 0
      %390 = vmatpush1.bf16.xpose.msra.mxu0 0
      %391 = vmatprep.subr.bf16.mxu0 0
      %392 = vmatpush1.bf16.xpose.msra.mxu0 0
      %393 = vmatprep.subr.bf16.mxu0 0
      %394 = vmatpush1.bf16.xpose.msra.mxu0 0
      %395 = vmatprep.subr.bf16.mxu0 0
      %396 = vmatpush1.bf16.xpose.msra.mxu0 0
      %397 = vmatprep.subr.bf16.mxu0 0
      %398 = vmatpush1.bf16.xpose.msra.mxu0 0
      %399 = vmatprep.subr.bf16.mxu0 0
      %400 = vmatpush1.bf16.xpose.msra.mxu0 0
      %401 = vmatprep.mubr.bf16.mxu0 0
      %402 = vmatmul.mubr.bf16.gmra.mrb[0].mxu0 %v368
      %v403 = vpop.f32.mrb[0].mxu0
      %v404 = vadd.f32 0.0, %v403
      %v405 = vpop.f32.mrb[0].mxu0
      %v406 = vpop.f32.mrb[0].mxu0
      %v407 = vpop.f32.mrb[0].mxu0
      %408 = vdwg.mxu0
      %410 = vset.pattern.permute.xlu0 0
      %411 = vperm.xlu0 %410, %v356
      %v412 = vpop.permute.xlu0 %411
      %v414 = vmul.f32 %v404, %v412
      %v415 = vadd.f32 %v414, %v357
      %vm416 = vcmask 130048
      %v417 = vsel %vm416, %v415, -inf
      %418 = vmax.xlane.f32.xlu0 %v417
      %v419 = vpop.xlane.xlu0 %418
      %v420 = vsub.f32 %v415, %v419
      %v421 = vmul.f32 %v420, 1.442695
      %v422 = vpow.pop %v421
      %v423 = vsel %vm416, %v422, 0.0
      %424 = vadd.xlane.f32.xlu0 %v423
      %v425 = vpop.xlane.xlu0 %424
      %v426 = vrcp.pop %v425
      %v427 = vmul.f32 %v422, %v426
      %v428 = vpack.c.bf16 %v427, %v427
      %v430 = vsel %vm416, %v428, 0
      %432 = vmatprep.subr.bf16.mxu0 0
      %433 = vmatpush1.bf16.msra.mxu0 %v354
      %434 = vmatprep.subr.bf16.mxu0 0
      %435 = vmatpush1.bf16.msra.mxu0 0
      %436 = vmatprep.subr.bf16.mxu0 0
      %437 = vmatpush1.bf16.msra.mxu0 0
      %438 = vmatprep.subr.bf16.mxu0 0
      %439 = vmatpush1.bf16.msra.mxu0 0
      %440 = vmatprep.subr.bf16.mxu0 0
      %441 = vmatpush1.bf16.msra.mxu0 0
      %442 = vmatprep.subr.bf16.mxu0 0
      %443 = vmatpush1.bf16.msra.mxu0 0
      %444 = vmatprep.subr.bf16.mxu0 0
      %445 = vmatpush1.bf16.msra.mxu0 0
      %446 = vmatprep.subr.bf16.mxu0 0
      %447 = vmatpush1.bf16.msra.mxu0 0
      %448 = vmatprep.subr.bf16.mxu0 0
      %449 = vmatpush1.bf16.msra.mxu0 0
      %450 = vmatprep.subr.bf16.mxu0 0
      %451 = vmatpush1.bf16.msra.mxu0 0
      %452 = vmatprep.subr.bf16.mxu0 0
      %453 = vmatpush1.bf16.msra.mxu0 0
      %454 = vmatprep.subr.bf16.mxu0 0
      %455 = vmatpush1.bf16.msra.mxu0 0
      %456 = vmatprep.subr.bf16.mxu0 0
      %457 = vmatpush1.bf16.msra.mxu0 0
      %458 = vmatprep.subr.bf16.mxu0 0
      %459 = vmatpush1.bf16.msra.mxu0 0
      %460 = vmatprep.subr.bf16.mxu0 0
      %461 = vmatpush1.bf16.msra.mxu0 0
      %462 = vmatprep.subr.bf16.mxu0 0
      %463 = vmatpush1.bf16.msra.mxu0 0
      %464 = vmatprep.mubr.bf16.mxu0 0
      %465 = vmatmul.mubr.bf16.gmra.mrb[0].mxu0 %v430
      %v466 = vpop.f32.mrb[0].mxu0
      %v467 = vadd.f32 0.0, %v466
      %v468 = vpop.f32.mrb[0].mxu0
      %v469 = vpop.f32.mrb[0].mxu0
      %v470 = vpop.f32.mrb[0].mxu0
      %471 = vdwg.mxu0
      %v472 = vpack.c.bf16 %v467, %v467
      %474 = vset.pattern.permute.xlu0 0
      %475 = vperm.xlu0 %474, %v359
      %v476 = vpop.permute.xlu0 %475
      %vm478 = vcmask 64512
      %v480 = vsel %vm478, %v358, 0
      %v483 = vsel %vm351, %v472, 0
      %485 = vmatprep.subr.bf16.mxu0 0
      %486 = vmatpush1.bf16.msra.mxu0 %v483
      %487 = vmatprep.subr.bf16.mxu0 0
      %488 = vmatpush1.bf16.msra.mxu0 0
      %489 = vmatprep.subr.bf16.mxu0 0
      %490 = vmatpush1.bf16.msra.mxu0 0
      %491 = vmatprep.subr.bf16.mxu0 0
      %492 = vmatpush1.bf16.msra.mxu0 0
      %493 = vmatprep.subr.bf16.mxu0 0
      %494 = vmatpush1.bf16.msra.mxu0 0
      %495 = vmatprep.subr.bf16.mxu0 0
      %496 = vmatpush1.bf16.msra.mxu0 0
      %497 = vmatprep.subr.bf16.mxu0 0
      %498 = vmatpush1.bf16.msra.mxu0 0
      %499 = vmatprep.subr.bf16.mxu0 0
      %500 = vmatpush1.bf16.msra.mxu0 0
      %501 = vmatprep.subr.bf16.mxu0 0
      %502 = vmatpush1.bf16.msra.mxu0 0
      %503 = vmatprep.subr.bf16.mxu0 0
      %504 = vmatpush1.bf16.msra.mxu0 0
      %505 = vmatprep.subr.bf16.mxu0 0
      %506 = vmatpush1.bf16.msra.mxu0 0
      %507 = vmatprep.subr.bf16.mxu0 0
      %508 = vmatpush1.bf16.msra.mxu0 0
      %509 = vmatprep.subr.bf16.mxu0 0
      %510 = vmatpush1.bf16.msra.mxu0 0
      %511 = vmatprep.subr.bf16.mxu0 0
      %512 = vmatpush1.bf16.msra.mxu0 0
      %513 = vmatprep.subr.bf16.mxu0 0
      %514 = vmatpush1.bf16.msra.mxu0 0
      %515 = vmatprep.subr.bf16.mxu0 0
      %516 = vmatpush1.bf16.msra.mxu0 0
      %517 = vmatprep.mubr.bf16.mxu0 0
      %518 = vmatmul.mubr.bf16.gmra.mrb[0].mxu0 %v480
      %v519 = vpop.f32.mrb[0].mxu0
      %v520 = vadd.f32 %v476, %v519
      %v521 = vpop.f32.mrb[0].mxu0
      %v522 = vpop.f32.mrb[0].mxu0
      %v523 = vpop.f32.mrb[0].mxu0
      %524 = vdwg.mxu0
      %525 = vst [vmem:[%s324] sm:$0xff] %v520
      %s526 = scalar_lea.vmem %s306, 4
      %v527 = vld [vmem:[%s526] sm:$0xf]
      %v528 = vunpack.c.l.bf16 %v527
      %v529 = vmul.f32 %v528, %v528
      %530 = vadd.xlane.f32.xlu0 %v529
      %v531 = vpop.xlane.xlu0 %530
      %v532 = vmax.f32 %v531, 1e-24
      %v533 = vrsqrt.pop %v532
      %v534 = vmul.f32 %v528, %v533
      %v535 = vpack.c.bf16 %v534, %v534
      %536 = vmatprep.subr.bf16.mxu0 0
      %537 = vmatpush1.bf16.xpose.msra.mxu0 %v347
      %538 = vmatprep.subr.bf16.mxu0 0
      %539 = vmatpush1.bf16.xpose.msra.mxu0 0
      %540 = vmatprep.subr.bf16.mxu0 0
      %541 = vmatpush1.bf16.xpose.msra.mxu0 0
      %542 = vmatprep.subr.bf16.mxu0 0
      %543 = vmatpush1.bf16.xpose.msra.mxu0 0
      %544 = vmatprep.subr.bf16.mxu0 0
      %545 = vmatpush1.bf16.xpose.msra.mxu0 0
      %546 = vmatprep.subr.bf16.mxu0 0
      %547 = vmatpush1.bf16.xpose.msra.mxu0 0
      %548 = vmatprep.subr.bf16.mxu0 0
      %549 = vmatpush1.bf16.xpose.msra.mxu0 0
      %550 = vmatprep.subr.bf16.mxu0 0
      %551 = vmatpush1.bf16.xpose.msra.mxu0 0
      %552 = vmatprep.subr.bf16.mxu0 0
      %553 = vmatpush1.bf16.xpose.msra.mxu0 0
      %554 = vmatprep.subr.bf16.mxu0 0
      %555 = vmatpush1.bf16.xpose.msra.mxu0 0
      %556 = vmatprep.subr.bf16.mxu0 0
      %557 = vmatpush1.bf16.xpose.msra.mxu0 0
      %558 = vmatprep.subr.bf16.mxu0 0
      %559 = vmatpush1.bf16.xpose.msra.mxu0 0
      %560 = vmatprep.subr.bf16.mxu0 0
      %561 = vmatpush1.bf16.xpose.msra.mxu0 0
      %562 = vmatprep.subr.bf16.mxu0 0
      %563 = vmatpush1.bf16.xpose.msra.mxu0 0
      %564 = vmatprep.subr.bf16.mxu0 0
      %565 = vmatpush1.bf16.xpose.msra.mxu0 0
      %566 = vmatprep.subr.bf16.mxu0 0
      %567 = vmatpush1.bf16.xpose.msra.mxu0 0
      %568 = vmatprep.mubr.bf16.mxu0 0
      %569 = vmatmul.mubr.bf16.gmra.mrb[0].mxu0 %v535
      %v570 = vpop.f32.mrb[0].mxu0
      %v571 = vadd.f32 0.0, %v570
      %v572 = vpop.f32.mrb[0].mxu0
      %v573 = vpop.f32.mrb[0].mxu0
      %v574 = vpop.f32.mrb[0].mxu0
      %575 = vdwg.mxu0
      %v576 = vmul.f32 %v571, %v412
      %v577 = vadd.f32 %v576, %v357
      %v578 = vsel %vm416, %v577, -inf
      %579 = vmax.xlane.f32.xlu0 %v578
      %v580 = vpop.xlane.xlu0 %579
      %v581 = vsub.f32 %v577, %v580
      %v582 = vmul.f32 %v581, 1.442695
      %v583 = vpow.pop %v582
      %v584 = vsel %vm416, %v583, 0.0
      %585 = vadd.xlane.f32.xlu0 %v584
      %v586 = vpop.xlane.xlu0 %585
      %v587 = vrcp.pop %v586
      %v588 = vmul.f32 %v583, %v587
      %v589 = vpack.c.bf16 %v588, %v588
      %v591 = vsel %vm416, %v589, 0
      %593 = vmatprep.subr.bf16.mxu0 0
      %594 = vmatpush1.bf16.msra.mxu0 %v354
      %595 = vmatprep.subr.bf16.mxu0 0
      %596 = vmatpush1.bf16.msra.mxu0 0
      %597 = vmatprep.subr.bf16.mxu0 0
      %598 = vmatpush1.bf16.msra.mxu0 0
      %599 = vmatprep.subr.bf16.mxu0 0
      %600 = vmatpush1.bf16.msra.mxu0 0
      %601 = vmatprep.subr.bf16.mxu0 0
      %602 = vmatpush1.bf16.msra.mxu0 0
      %603 = vmatprep.subr.bf16.mxu0 0
      %604 = vmatpush1.bf16.msra.mxu0 0
      %605 = vmatprep.subr.bf16.mxu0 0
      %606 = vmatpush1.bf16.msra.mxu0 0
      %607 = vmatprep.subr.bf16.mxu0 0
      %608 = vmatpush1.bf16.msra.mxu0 0
      %609 = vmatprep.subr.bf16.mxu0 0
      %610 = vmatpush1.bf16.msra.mxu0 0
      %611 = vmatprep.subr.bf16.mxu0 0
      %612 = vmatpush1.bf16.msra.mxu0 0
      %613 = vmatprep.subr.bf16.mxu0 0
      %614 = vmatpush1.bf16.msra.mxu0 0
      %615 = vmatprep.subr.bf16.mxu0 0
      %616 = vmatpush1.bf16.msra.mxu0 0
      %617 = vmatprep.subr.bf16.mxu0 0
      %618 = vmatpush1.bf16.msra.mxu0 0
      %619 = vmatprep.subr.bf16.mxu0 0
      %620 = vmatpush1.bf16.msra.mxu0 0
      %621 = vmatprep.subr.bf16.mxu0 0
      %622 = vmatpush1.bf16.msra.mxu0 0
      %623 = vmatprep.subr.bf16.mxu0 0
      %624 = vmatpush1.bf16.msra.mxu0 0
      %625 = vmatprep.mubr.bf16.mxu0 0
      %626 = vmatmul.mubr.bf16.gmra.mrb[0].mxu0 %v591
      %v627 = vpop.f32.mrb[0].mxu0
      %v628 = vadd.f32 0.0, %v627
      %v629 = vpop.f32.mrb[0].mxu0
      %v630 = vpop.f32.mrb[0].mxu0
      %v631 = vpop.f32.mrb[0].mxu0
      %632 = vdwg.mxu0
      %v633 = vpack.c.bf16 %v628, %v628
      %v635 = vsel %vm351, %v633, 0
      %637 = vmatprep.subr.bf16.mxu0 0
      %638 = vmatpush1.bf16.msra.mxu0 %v635
      %639 = vmatprep.subr.bf16.mxu0 0
      %640 = vmatpush1.bf16.msra.mxu0 0
      %641 = vmatprep.subr.bf16.mxu0 0
      %642 = vmatpush1.bf16.msra.mxu0 0
      %643 = vmatprep.subr.bf16.mxu0 0
      %644 = vmatpush1.bf16.msra.mxu0 0
      %645 = vmatprep.subr.bf16.mxu0 0
      %646 = vmatpush1.bf16.msra.mxu0 0
      %647 = vmatprep.subr.bf16.mxu0 0
      %648 = vmatpush1.bf16.msra.mxu0 0
      %649 = vmatprep.subr.bf16.mxu0 0
      %650 = vmatpush1.bf16.msra.mxu0 0
      %651 = vmatprep.subr.bf16.mxu0 0
      %652 = vmatpush1.bf16.msra.mxu0 0
      %653 = vmatprep.subr.bf16.mxu0 0
      %654 = vmatpush1.bf16.msra.mxu0 0
      %655 = vmatprep.subr.bf16.mxu0 0
      %656 = vmatpush1.bf16.msra.mxu0 0
      %657 = vmatprep.subr.bf16.mxu0 0
      %658 = vmatpush1.bf16.msra.mxu0 0
      %659 = vmatprep.subr.bf16.mxu0 0
      %660 = vmatpush1.bf16.msra.mxu0 0
      %661 = vmatprep.subr.bf16.mxu0 0
      %662 = vmatpush1.bf16.msra.mxu0 0
      %663 = vmatprep.subr.bf16.mxu0 0
      %664 = vmatpush1.bf16.msra.mxu0 0
      %665 = vmatprep.subr.bf16.mxu0 0
      %666 = vmatpush1.bf16.msra.mxu0 0
      %667 = vmatprep.subr.bf16.mxu0 0
      %668 = vmatpush1.bf16.msra.mxu0 0
      %669 = vmatprep.mubr.bf16.mxu0 0
      %670 = vmatmul.mubr.bf16.gmra.mrb[0].mxu0 %v480
      %v671 = vpop.f32.mrb[0].mxu0
      %v672 = vadd.f32 %v476, %v671
      %v673 = vpop.f32.mrb[0].mxu0
      %v674 = vpop.f32.mrb[0].mxu0
      %v675 = vpop.f32.mrb[0].mxu0
      %676 = vdwg.mxu0
      %s677 = scalar_lea.vmem %s324, 8
      %678 = vst [vmem:[%s677] sm:$0xff] %v672
      %s679 = smul.u32 2, %s18
      %p680 = scmp.lt.s32.totalorder %s679, 3
      %s681 = scalar_select %p680, %s679, 3
      %s682 = smul.addr %s681, 8
      %s683 = scalar_lea.vmem %s7, %s682
      // Predicated region
      $region49: #{tr_attention_forward.7} parent=47 // pred_check
        %p684 = pneg %p198
      $region50: #{tr_attention_forward.7} parent=47 // pred_check_branch
        %686 = sbr.rel (%p684) target = $region52
      $region51: #{tr_attention_forward.7} parent=47 // pred_region
        %s687 = smul.u32 2, %s18
      $region52: #{tr_attention_forward.7} parent=47 // pred_fallthru
        _
    $region48: #{tr_attention_forward.7} parent=5 // pred_fallthru
      _
    %p688 = scmp.le.s32.totalorder 2, %s13
    // Predicated region
    $region53: #{tr_attention_forward.7} parent=5 // pred_check
      %p689 = pneg %p688
    $region54: #{tr_attention_forward.7} parent=5 // pred_check_branch
      %691 = sbr.rel (%p689) target = $region56
    $region55: #{tr_attention_forward.7} parent=5 // pred_region
      %s692 = ssub.s32 %s13, 2
      // Predicated region
      $region57: #{tr_attention_forward.7} parent=55 // pred_check
        %p693 = pneg %p204
      $region58: #{tr_attention_forward.7} parent=55 // pred_check_branch
        %695 = sbr.rel (%p693) target = $region60
      $region59: #{tr_attention_forward.7} parent=55 // pred_region
        %s696 = smul.u32 2, %s19
        %p697 = scmp.lt.s32.totalorder %s696, 3
        %s698 = scalar_select %p697, %s696, 3
        %s699 = smul.addr %s698, 8
        %s700 = scalar_lea.vmem %s7, %s699
      $region60: #{tr_attention_forward.7} parent=55 // pred_fallthru
        _
    $region56: #{tr_attention_forward.7} parent=5 // pred_fallthru
      _
  $region6: #{tr_attention_forward.7} parent=0 // loop_footer
    %s17 = sadd.s32 1, %s13
  $region7: #{tr_attention_forward.7} parent=0 // loop_footer_branch
    %12 = sbr.rel target = $region3
  $region8: #{tr_attention_forward.7} parent=0 // loop_exit
    _

</llo_original>
